<compile_context>
chip_gen: v7x
topology: tpu7x:2x2x1
jax: 0.10.0
libtpu: 0.0.40
codegen_flags: <defaults>
</compile_context>

<pallas_src>
import numpy as np
import jax
import jax.numpy as jnp
from jax import lax
from jax.experimental import pallas as pl
from jax.experimental.pallas import tpu as pltpu

WIN = 11            # window_size
SIGMA = 1.5
C1 = (0.01 * 1.0) ** 2    # L = 1 (val_range default inside ssim())
C2 = (0.03 * 1.0) ** 2
LANE = 128
SUBLANE = 8


def gaussian_1d(window_size=WIN, sigma=SIGMA):
    """1-D gaussian, normalized (matches torch gaussian())."""
    x = np.arange(window_size, dtype=np.float64)
    g = np.exp(-((x - window_size // 2) ** 2) / (2.0 * sigma ** 2))
    return (g / g.sum()).astype(np.float32)


def create_window(window_size=WIN, sigma=SIGMA):
    """2D gaussian window (for the plain-JAX reference)."""
    g = jnp.asarray(gaussian_1d(window_size, sigma))
    return jnp.outer(g, g).astype(jnp.float32)


def band_matrices(H, W, window_size=WIN):
    """Banded matrices (lane/sublane padded) so valid-conv with outer(g,g)
    equals Rv @ X @ Rh.

    Rv : (Hpad, H)  rows >= Hout are zero
    Rh : (W, Wpad)  cols >= Wout are zero
    The zero rows/cols make every conv output exactly 0 on the padded region,
    so the padded ssim_map entries are exactly 1.0 and can be masked out.
    """
    g = gaussian_1d(window_size)
    Hout, Wout = H - window_size + 1, W - window_size + 1
    Hpad = max(SUBLANE, ((Hout + SUBLANE - 1) // SUBLANE) * SUBLANE)
    Wpad = max(LANE, ((Wout + LANE - 1) // LANE) * LANE)
    Rv = np.zeros((Hpad, H), np.float32)
    for o in range(Hout):
        Rv[o, o:o + window_size] = g          # out[o,:] = sum_k g[k] x[o+k,:]
    Rh = np.zeros((W, Wpad), np.float32)
    for o in range(Wout):
        Rh[o:o + window_size, o] = g          # out[:,o] = sum_k g[k] x[:,o+k]
    return jnp.asarray(Rv), jnp.asarray(Rh), Hout, Wout, Hpad, Wpad


def _tpu_vmem_bytes():
    """Physical VMEM capacity (per core), with a conservative fallback."""
    default = 64 << 20
    try:
        info = pltpu.get_tpu_info()
        for name in ("vmem_capacity_bytes", "vmem_bytes"):
            v = getattr(info, name, None)
            if v:
                return int(v)
    except Exception:
        pass
    return default


def _tpu_core_count():
    """TensorCores per chip (best effort; 1 on v5e/v6e, 2 on v7x)."""
    try:
        info = pltpu.get_tpu_info()
        for name in ("num_cores", "core_count", "num_tensorcores"):
            v = getattr(info, name, None)
            if v:
                return int(v)
    except Exception:
        pass
    return 1


def _choose_pack(BC, H, W, Hpad, Wpad, vmem_cap):
    """Planes packed per grid step, from the real per-step VMEM footprint."""
    fixed = 2 * 4 * (Hpad * H + W * Wpad)          # Rv + Rh (double-buffered)
    per_plane = 4 * (2 * 2 * H * W                 # img blocks: 2 imgs x 2 bufs
                     + 5 * H * W                   # stacked conv inputs S
                     + 2 * 5 * H * Wpad)           # pass-1 result + VMEM scratch
    budget = max(per_plane, vmem_cap // 2 - fixed - (2 << 20))
    p_max = max(1, budget // per_plane)

    def legal(d):
        # A block smaller than the full array must keep its sublane dim
        # (d * H) 8-aligned; the full-array block (d == BC) is always legal.
        return d == BC or (d * H) % SUBLANE == 0

    divisors = [d for d in range(1, BC + 1) if BC % d == 0 and legal(d)]
    fitting = [d for d in divisors if d <= p_max]
    P = max(fitting) if fitting else min(divisors)

    # Only force extra grid steps when there is >1 TensorCore to shard onto
    # (v7x); on single-TC v5e/v6e extra steps are pure per-step overhead.
    cores = _tpu_core_count()
    if cores > 1:
        shardable = [d for d in divisors if d <= P and (BC // d) % cores == 0]
        if shardable:
            P = max(shardable)
    return P


def _make_kernel(P, H, Hout, Wout, Hpad, Wpad):
    def ssim_kernel(rv_ref, rh_ref, img1_ref, img2_ref, out_ref, t_ref):
        """One grid step = P packed (H, W) planes of (batch*channel).

        rv_ref  : (Hpad, H)        f32 VMEM  -- vertical banded gaussian
        rh_ref  : (W, Wpad)        f32 VMEM  -- horizontal banded gaussian
        img?_ref: (P*H, W)         f32 VMEM  -- P planes stacked along rows
        out_ref : (1, 1, 1)        f32 VMEM  -- partial sum of ssim_map
        t_ref   : (5*P, H, Wpad)   f32 VMEM scratch -- pass-1 (horizontal) out
        """
        Rv = rv_ref[...]
        Rh = rh_ref[...]

        # The whole block feeds one batched matmul, so the +1 bias and the
        # products are computed block-wide (they live in VMEM, not vregs).
        a = img1_ref[...] + 1.0                    # img1 += 1   (P*H, W)
        b = img2_ref[...] + 1.0                    # img2 += 1
        # Five conv inputs for all P planes, stacked along rows
        # (product-major): rows [i*P*H + p*H + h].
        S = jnp.concatenate([a, b, a * a, b * b, a * b], axis=0)   # (5*P*H, W)

        # Pass 1 (horizontal): ONE large MXU matmul for all planes & products.
        T = jnp.dot(S, Rh, preferred_element_type=jnp.float32)     # (5*P*H, Wpad)
        t_ref[...] = T.reshape(5 * P, H, Wpad)

        # Mask for the lane/sublane padding (padded ssim_map entries are 1.0).
        row_ids = lax.broadcasted_iota(jnp.int32, (Hpad, Wpad), 0)
        col_ids = lax.broadcasted_iota(jnp.int32, (Hpad, Wpad), 1)
        valid = (row_ids < Hout) & (col_ids < Wout)

        def plane_body(p, acc):
            # Pass 2 (vertical), one plane at a time (fori_loop bounds live
            # ranges).  All five matmuls are lane-dense: N = Wpad % 128 == 0.
            mu1 = jnp.dot(Rv, t_ref[p], preferred_element_type=jnp.float32)
            mu2 = jnp.dot(Rv, t_ref[P + p], preferred_element_type=jnp.float32)
            e11 = jnp.dot(Rv, t_ref[2 * P + p], preferred_element_type=jnp.float32)
            e22 = jnp.dot(Rv, t_ref[3 * P + p], preferred_element_type=jnp.float32)
            e12 = jnp.dot(Rv, t_ref[4 * P + p], preferred_element_type=jnp.float32)

            mu1_sq = mu1 * mu1
            mu2_sq = mu2 * mu2
            mu1_mu2 = mu1 * mu2
            sigma1_sq = e11 - mu1_sq
            sigma2_sq = e22 - mu2_sq
            sigma12 = e12 - mu1_mu2

            v1 = 2.0 * sigma12 + C2
            v2 = sigma1_sq + sigma2_sq + C2
            # NOTE: pl.reciprocal(..., approx=True) would move this divide to
            # the EUP but its ~2e-4 error can exceed the 1e-4 rtol; keep exact.
            ssim_map = ((2.0 * mu1_mu2 + C1) * v1) / ((mu1_sq + mu2_sq + C1) * v2)
            return acc + jnp.where(valid, ssim_map, 0.0)

        acc = lax.fori_loop(0, P, plane_body,
                            jnp.zeros((Hpad, Wpad), jnp.float32))
        out_ref[...] = jnp.sum(acc).reshape(1, 1, 1)

    return ssim_kernel


def ssim_pallas(img1, img2):
    """img1, img2: (B, C, H, W) float32 (NCHW, same as the PyTorch module)."""
    B, C, H, W = img1.shape
    assert H >= WIN and W >= WIN, "image smaller than the 11x11 window"
    BC = B * C

    Rv, Rh, Hout, Wout, Hpad, Wpad = band_matrices(H, W)

    # (B, C, H, W) -> (BC*H, W): free reshape, planes stacked along rows.
    x1 = img1.astype(jnp.float32).reshape(BC * H, W)
    x2 = img2.astype(jnp.float32).reshape(BC * H, W)

    vmem_cap = _tpu_vmem_bytes()
    P = _choose_pack(BC, H, W, Hpad, Wpad, vmem_cap)
    nsteps = BC // P
    vmem_limit = int(min(max(32 << 20, (vmem_cap * 3) // 4), 100 << 20))

    kernel = _make_kernel(P, H, Hout, Wout, Hpad, Wpad)

    partials = pl.pallas_call(
        kernel,
        out_shape=jax.ShapeDtypeStruct((nsteps, 1, 1), jnp.float32),
        grid_spec=pltpu.PrefetchScalarGridSpec(
            num_scalar_prefetch=0,
            grid=(nsteps,),
            in_specs=[
                # Rv/Rh are small constants (constant index_map -> never
                # re-fetched); single-buffering them (pl.Buffered(1)) would
                # save a little VMEM but is left at the default for safety.
                pl.BlockSpec((Hpad, H), lambda i: (0, 0)),       # Rv
                pl.BlockSpec((W, Wpad), lambda i: (0, 0)),       # Rh
                pl.BlockSpec((P * H, W), lambda i: (i, 0)),      # img1 planes
                pl.BlockSpec((P * H, W), lambda i: (i, 0)),      # img2 planes
            ],
            out_specs=pl.BlockSpec((1, 1, 1), lambda i: (i, 0, 0)),
            scratch_shapes=[pltpu.VMEM((5 * P, H, Wpad), jnp.float32)],
        ),
        compiler_params=pltpu.CompilerParams(
            dimension_semantics=("parallel",),
            vmem_limit_bytes=vmem_limit),
    )(Rv, Rh, x1, x2)

    # size_average=True -> ssim_map.mean() over (B, C, Hout, Wout)
    return jnp.sum(partials) / jnp.float32(BC * Hout * Wout)


def ssim_reference(img1, img2):
    """Plain-JAX reference (mirrors F.conv2d with groups=channel)."""
    B, C, H, W = img1.shape
    window = create_window(WIN, SIGMA)
    a = img1.astype(jnp.float32) + 1.0
    b = img2.astype(jnp.float32) + 1.0
    w = jnp.broadcast_to(window[None, None], (C, 1, WIN, WIN))

    def conv(x):
        return jax.lax.conv_general_dilated(
            x, w, window_strides=(1, 1), padding="VALID",
            feature_group_count=C,
            dimension_numbers=("NCHW", "OIHW", "NCHW"))

    mu1, mu2 = conv(a), conv(b)
    s1 = conv(a * a) - mu1 * mu1
    s2 = conv(b * b) - mu2 * mu2
    s12 = conv(a * b) - mu1 * mu2
    v1 = 2.0 * s12 + C2
    v2 = s1 + s2 + C2
    ssim_map = ((2.0 * mu1 * mu2 + C1) * v1) / ((mu1 * mu1 + mu2 * mu2 + C1) * v2)
    return jnp.mean(ssim_map)


if __name__ == "__main__":
    key = jax.random.PRNGKey(0)
    k1, k2 = jax.random.split(key)
    B, C, H, W = 2, 4, 16, 16
    img1 = jax.random.uniform(k1, (B, C, H, W), dtype=jnp.float32)
    img2 = jax.random.uniform(k2, (B, C, H, W), dtype=jnp.float32)

    out = jax.block_until_ready(ssim_pallas(img1, img2))
    ref = jax.block_until_ready(ssim_reference(img1, img2))

    np.testing.assert_allclose(np.asarray(out), np.asarray(ref),
                               rtol=1e-4, atol=1e-5)
    print("KERNEL_OK")
</pallas_src>

<mosaic_0001>
module attributes {stable_mosaic.version = 11 : i64} {
  func.func @ssim_kernel(%arg0: i32, %arg1: memref<8x16xf32, #tpu.memory_space<vmem>>, %arg2: memref<16x128xf32, #tpu.memory_space<vmem>>, %arg3: memref<128x16xf32, #tpu.memory_space<vmem>>, %arg4: memref<128x16xf32, #tpu.memory_space<vmem>>, %arg5: memref<1x1x1xf32, #tpu.memory_space<vmem>>, %arg6: memref<40x16x128xf32, #tpu.memory_space<vmem>>) attributes {dimension_semantics = [#tpu.dimension_semantics<parallel>], iteration_bounds = array<i64: 1>, scalar_prefetch = 0 : i64, scratch_operands = 1 : i64, tpu.core_type = #tpu.core_type<tc>, window_params = [{pipeline_mode = #tpu.pipeline_mode<synchronous>, transform_indices = @transform_0, window_bounds = array<i64: 8, 16>}, {pipeline_mode = #tpu.pipeline_mode<synchronous>, transform_indices = @transform_1, window_bounds = array<i64: 16, 128>}, {transform_indices = @transform_2, window_bounds = array<i64: 128, 16>}, {transform_indices = @transform_3, window_bounds = array<i64: 128, 16>}, {transform_indices = @transform_4, window_bounds = array<i64: 1, 1, 1>}]} {
    %c0 = arith.constant 0 : index
    %c0_0 = arith.constant 0 : index
    %0 = vector.load %arg1[%c0, %c0_0] : memref<8x16xf32, #tpu.memory_space<vmem>>, vector<8x16xf32>
    %c0_1 = arith.constant 0 : index
    %c0_2 = arith.constant 0 : index
    %1 = vector.load %arg2[%c0_1, %c0_2] : memref<16x128xf32, #tpu.memory_space<vmem>>, vector<16x128xf32>
    %c0_3 = arith.constant 0 : index
    %c0_4 = arith.constant 0 : index
    %2 = vector.load %arg3[%c0_3, %c0_4] : memref<128x16xf32, #tpu.memory_space<vmem>>, vector<128x16xf32>
    %cst = arith.constant 1.000000e+00 : f32
    %3 = vector.broadcast %cst : f32 to vector<128x16xf32>
    %4 = arith.addf %2, %3 : vector<128x16xf32>
    %c0_5 = arith.constant 0 : index
    %c0_6 = arith.constant 0 : index
    %5 = vector.load %arg4[%c0_5, %c0_6] : memref<128x16xf32, #tpu.memory_space<vmem>>, vector<128x16xf32>
    %cst_7 = arith.constant 1.000000e+00 : f32
    %6 = vector.broadcast %cst_7 : f32 to vector<128x16xf32>
    %7 = arith.addf %5, %6 : vector<128x16xf32>
    %8 = arith.mulf %4, %4 : vector<128x16xf32>
    %9 = arith.mulf %7, %7 : vector<128x16xf32>
    %10 = arith.mulf %4, %7 : vector<128x16xf32>
    %11 = tpu.concatenate %4, %7, %8, %9, %10 in 0 : vector<128x16xf32>, vector<128x16xf32>, vector<128x16xf32>, vector<128x16xf32>, vector<128x16xf32> -> vector<640x16xf32>
    %cst_8 = arith.constant dense<0.000000e+00> : vector<640x128xf32>
    %12 = tpu.matmul %11, %1, %cst_8 {dimension_numbers = #tpu.dot_dimension_numbers<[1], [0], [0], [1], [0, 0, 1, 1], [], []>} : vector<640x16xf32>, vector<16x128xf32>, vector<640x128xf32> -> vector<640x128xf32>
    %13 = vector.shape_cast %12 : vector<640x128xf32> to vector<40x16x128xf32>
    %c0_9 = arith.constant 0 : index
    %c0_10 = arith.constant 0 : index
    %c0_11 = arith.constant 0 : index
    %14 = vector.load %arg6[%c0_9, %c0_10, %c0_11] : memref<40x16x128xf32, #tpu.memory_space<vmem>>, vector<40x16x128xf32>
    tpu.vector_store %arg6[%c0_9, %c0_10, %c0_11], %13 {strides = array<i32>} : memref<40x16x128xf32, #tpu.memory_space<vmem>>, vector<40x16x128xf32>,
    %15 = tpu.iota {dimensions = array<i32: 0>} : vector<8x128xi32>
    %16 = tpu.iota {dimensions = array<i32: 1>} : vector<8x128xi32>
    %c6_i32 = arith.constant 6 : i32
    %17 = vector.broadcast %c6_i32 : i32 to vector<8x128xi32>
    %18 = arith.cmpi slt, %15, %17 : vector<8x128xi32>
    %c6_i32_12 = arith.constant 6 : i32
    %19 = vector.broadcast %c6_i32_12 : i32 to vector<8x128xi32>
    %20 = arith.cmpi slt, %16, %19 : vector<8x128xi32>
    %21 = arith.andi %18, %20 : vector<8x128xi1>
    %cst_13 = arith.constant 0.000000e+00 : f32
    %22 = vector.broadcast %cst_13 : f32 to vector<8x128xf32>
    %c0_i32 = arith.constant 0 : i32
    %c8_i32 = arith.constant 8 : i32
    %23 = arith.addi %c0_i32, %c8_i32 : i32
    %c1_i32 = arith.constant 1 : i32
    %24 = scf.for %arg7 = %c0_i32 to %23 step %c1_i32 iter_args(%arg8 = %22) -> (vector<8x128xf32>)  : i32 {
      %31 = arith.index_cast %arg7 : i32 to index
      %c0_19 = arith.constant 0 : index
      %c0_20 = arith.constant 0 : index
      %32 = vector.load %arg6[%31, %c0_19, %c0_20] : memref<40x16x128xf32, #tpu.memory_space<vmem>>, vector<1x16x128xf32>
      %33 = vector.shape_cast %32 : vector<1x16x128xf32> to vector<16x128xf32>
      %cst_21 = arith.constant dense<0.000000e+00> : vector<8x128xf32>
      %34 = tpu.matmul %0, %33, %cst_21 {dimension_numbers = #tpu.dot_dimension_numbers<[1], [0], [0], [1], [0, 0, 1, 1], [], []>} : vector<8x16xf32>, vector<16x128xf32>, vector<8x128xf32> -> vector<8x128xf32>
      %c8_i32_22 = arith.constant 8 : i32
      %35 = arith.addi %c8_i32_22, %arg7 : i32
      %36 = arith.index_cast %35 : i32 to index
      %c0_23 = arith.constant 0 : index
      %c0_24 = arith.constant 0 : index
      %37 = vector.load %arg6[%36, %c0_23, %c0_24] : memref<40x16x128xf32, #tpu.memory_space<vmem>>, vector<1x16x128xf32>
      %38 = vector.shape_cast %37 : vector<1x16x128xf32> to vector<16x128xf32>
      %cst_25 = arith.constant dense<0.000000e+00> : vector<8x128xf32>
      %39 = tpu.matmul %0, %38, %cst_25 {dimension_numbers = #tpu.dot_dimension_numbers<[1], [0], [0], [1], [0, 0, 1, 1], [], []>} : vector<8x16xf32>, vector<16x128xf32>, vector<8x128xf32> -> vector<8x128xf32>
      %c16_i32 = arith.constant 16 : i32
      %40 = arith.addi %c16_i32, %arg7 : i32
      %41 = arith.index_cast %40 : i32 to index
      %c0_26 = arith.constant 0 : index
      %c0_27 = arith.constant 0 : index
      %42 = vector.load %arg6[%41, %c0_26, %c0_27] : memref<40x16x128xf32, #tpu.memory_space<vmem>>, vector<1x16x128xf32>
      %43 = vector.shape_cast %42 : vector<1x16x128xf32> to vector<16x128xf32>
      %cst_28 = arith.constant dense<0.000000e+00> : vector<8x128xf32>
      %44 = tpu.matmul %0, %43, %cst_28 {dimension_numbers = #tpu.dot_dimension_numbers<[1], [0], [0], [1], [0, 0, 1, 1], [], []>} : vector<8x16xf32>, vector<16x128xf32>, vector<8x128xf32> -> vector<8x128xf32>
      %c24_i32 = arith.constant 24 : i32
      %45 = arith.addi %c24_i32, %arg7 : i32
      %46 = arith.index_cast %45 : i32 to index
      %c0_29 = arith.constant 0 : index
      %c0_30 = arith.constant 0 : index
      %47 = vector.load %arg6[%46, %c0_29, %c0_30] : memref<40x16x128xf32, #tpu.memory_space<vmem>>, vector<1x16x128xf32>
      %48 = vector.shape_cast %47 : vector<1x16x128xf32> to vector<16x128xf32>
      %cst_31 = arith.constant dense<0.000000e+00> : vector<8x128xf32>
      %49 = tpu.matmul %0, %48, %cst_31 {dimension_numbers = #tpu.dot_dimension_numbers<[1], [0], [0], [1], [0, 0, 1, 1], [], []>} : vector<8x16xf32>, vector<16x128xf32>, vector<8x128xf32> -> vector<8x128xf32>
      %c32_i32 = arith.constant 32 : i32
      %50 = arith.addi %c32_i32, %arg7 : i32
      %51 = arith.index_cast %50 : i32 to index
      %c0_32 = arith.constant 0 : index
      %c0_33 = arith.constant 0 : index
      %52 = vector.load %arg6[%51, %c0_32, %c0_33] : memref<40x16x128xf32, #tpu.memory_space<vmem>>, vector<1x16x128xf32>
      %53 = vector.shape_cast %52 : vector<1x16x128xf32> to vector<16x128xf32>
      %cst_34 = arith.constant dense<0.000000e+00> : vector<8x128xf32>
      %54 = tpu.matmul %0, %53, %cst_34 {dimension_numbers = #tpu.dot_dimension_numbers<[1], [0], [0], [1], [0, 0, 1, 1], [], []>} : vector<8x16xf32>, vector<16x128xf32>, vector<8x128xf32> -> vector<8x128xf32>
      %55 = arith.mulf %34, %34 : vector<8x128xf32>
      %56 = arith.mulf %39, %39 : vector<8x128xf32>
      %57 = arith.mulf %34, %39 : vector<8x128xf32>
      %58 = arith.subf %44, %55 : vector<8x128xf32>
      %59 = arith.subf %49, %56 : vector<8x128xf32>
      %60 = arith.subf %54, %57 : vector<8x128xf32>
      %cst_35 = arith.constant 2.000000e+00 : f32
      %61 = vector.broadcast %cst_35 : f32 to vector<8x128xf32>
      %62 = arith.mulf %61, %60 : vector<8x128xf32>
      %cst_36 = arith.constant 8.99999984E-4 : f32
      %63 = vector.broadcast %cst_36 : f32 to vector<8x128xf32>
      %64 = arith.addf %62, %63 : vector<8x128xf32>
      %65 = arith.addf %58, %59 : vector<8x128xf32>
      %cst_37 = arith.constant 8.99999984E-4 : f32
      %66 = vector.broadcast %cst_37 : f32 to vector<8x128xf32>
      %67 = arith.addf %65, %66 : vector<8x128xf32>
      %cst_38 = arith.constant 2.000000e+00 : f32
      %68 = vector.broadcast %cst_38 : f32 to vector<8x128xf32>
      %69 = arith.mulf %68, %57 : vector<8x128xf32>
      %cst_39 = arith.constant 9.99999974E-5 : f32
      %70 = vector.broadcast %cst_39 : f32 to vector<8x128xf32>
      %71 = arith.addf %69, %70 : vector<8x128xf32>
      %72 = arith.mulf %71, %64 : vector<8x128xf32>
      %73 = arith.addf %55, %56 : vector<8x128xf32>
      %cst_40 = arith.constant 9.99999974E-5 : f32
      %74 = vector.broadcast %cst_40 : f32 to vector<8x128xf32>
      %75 = arith.addf %73, %74 : vector<8x128xf32>
      %76 = arith.mulf %75, %67 : vector<8x128xf32>
      %77 = arith.divf %72, %76 : vector<8x128xf32>
      %cst_41 = arith.constant 0.000000e+00 : f32
      %78 = vector.broadcast %cst_41 : f32 to vector<8x128xf32>
      %79 = arith.select %21, %77, %78 : vector<8x128xi1>, vector<8x128xf32>
      %80 = arith.addf %arg8, %79 : vector<8x128xf32>
      scf.yield %80 : vector<8x128xf32>
    }
    %c8_i32_14 = arith.constant 8 : i32
    %25 = vector.shape_cast %24 : vector<8x128xf32> to vector<1x8x128xf32>
    %cst_15 = arith.constant dense<0.000000e+00> : vector<1xf32>
    %26 = vector.multi_reduction <add>, %25, %cst_15 [1, 2] : vector<1x8x128xf32> to vector<1xf32>
    %27 = vector.shape_cast %26 : vector<1xf32> to vector<1x1x1xf32>
    %28 = vector.extract %27[0, 0, 0] : f32 from vector<1x1x1xf32>
    %29 = vector.broadcast %28 : f32 to vector<1x1x1xf32>
    %c0_16 = arith.constant 0 : index
    %c0_17 = arith.constant 0 : index
    %c0_18 = arith.constant 0 : index
    %30 = vector.load %arg5[%c0_16, %c0_17, %c0_18] : memref<1x1x1xf32, #tpu.memory_space<vmem>>, vector<1x1x1xf32>
    tpu.vector_store %arg5[%c0_16, %c0_17, %c0_18], %29 {strides = array<i32>} : memref<1x1x1xf32, #tpu.memory_space<vmem>>, vector<1x1x1xf32>,
    return
  }
  func.func @transform_0(%arg0: i32) -> (i32, i32) {
    %c0_i32 = arith.constant 0 : i32
    %c0_i32_0 = arith.constant 0 : i32
    %c0_i32_1 = arith.constant 0 : i32
    return %c0_i32, %c0_i32_0 : i32, i32
  }
  func.func @transform_1(%arg0: i32) -> (i32, i32) {
    %c0_i32 = arith.constant 0 : i32
    %c0_i32_0 = arith.constant 0 : i32
    %c0_i32_1 = arith.constant 0 : i32
    return %c0_i32, %c0_i32_0 : i32, i32
  }
  func.func @transform_2(%arg0: i32) -> (i32, i32) {
    %c0_i32 = arith.constant 0 : i32
    %c0_i32_0 = arith.constant 0 : i32
    return %arg0, %c0_i32 : i32, i32
  }
  func.func @transform_3(%arg0: i32) -> (i32, i32) {
    %c0_i32 = arith.constant 0 : i32
    %c0_i32_0 = arith.constant 0 : i32
    return %arg0, %c0_i32 : i32, i32
  }
  func.func @transform_4(%arg0: i32) -> (i32, i32, i32) {
    %c0_i32 = arith.constant 0 : i32
    %c0_i32_0 = arith.constant 0 : i32
    %c0_i32_1 = arith.constant 0 : i32
    return %arg0, %c0_i32, %c0_i32_0 : i32, i32, i32
  }
}

</mosaic_0001>

<llo_original>
// kernel: tpu_custom_call.1
$region0: #{tpu_custom_call.1}
  #allocation0 [shape = 'u32[]', space=smem, size = 0x4, offset = 0x4, fixed_abs, tag = 'smem constant byte address 0x4 - core index']
  #allocation1 [shape = 'u32[144,128]{1,0:T(1,128)}', space=vmem, size = 0x12000, scoped, tag = 'internal scratch']
  #allocation2 [shape = 'f32[40,16,128]{2,1,0:T(8,128)}', space=vmem, size = 0x50000, scoped, tag = 'scratch operand']
  %s0 = inlined_call_operand.vmem [shape: f32[8,16], index: 0, kind: input, shape index: {}]
  %s1 = inlined_call_operand.vmem [shape: f32[16,128], index: 1, kind: input, shape index: {}]
  %s2 = inlined_call_operand.vmem [shape: f32[128,16], index: 2, kind: input, shape index: {}]
  %s3 = inlined_call_operand.vmem [shape: f32[128,16], index: 3, kind: input, shape index: {}]
  %s4 = inlined_call_operand.hbm [shape: f32[1,1,1], index: 4, kind: output, shape index: {}]
  %s5 = sld [smem:[#allocation0]]
  $region33: #{tpu_custom_call.1} parent=0
    _
  %s7 = ssub.s32 1, %s5
  %s8 = scalar_select 0, %s7, %s5
  $region1: #{tpu_custom_call.1} parent=0
    #allocation3 [shape = 'u8[512]{0}', space=vmem, size = 0x400, scoped, tag = 'output window, operand 0, single buffered']
    #allocation4 [shape = 's32[1]{0}', space=sflag, size = 0x4, scoped, tag = 'scoped memory for tpu_custom_call.1']
    %9 = vsyncpa [#allocation4], 0
    // Predicated region
    $region2: #{tpu_custom_call.1} parent=1 // pred_check
      _
    $region3: #{tpu_custom_call.1} parent=1 // pred_check_branch
      %11 = sbr.rel (0) target = $region5
    $region4: #{tpu_custom_call.1} parent=1 // pred_region
      _
    $region5: #{tpu_custom_call.1} parent=1 // pred_fallthru
      _
    // Predicated region
    $region6: #{tpu_custom_call.1} parent=1 // pred_check
      _
    $region7: #{tpu_custom_call.1} parent=1 // pred_check_branch
      %13 = sbr.rel (0) target = $region9
    $region8: #{tpu_custom_call.1} parent=1 // pred_region
      _
    $region9: #{tpu_custom_call.1} parent=1 // pred_fallthru
      _
    // Predicated region
    $region10: #{tpu_custom_call.1} parent=1 // pred_check
      _
    $region11: #{tpu_custom_call.1} parent=1 // pred_check_branch
      %15 = sbr.rel (0) target = $region13
    $region12: #{tpu_custom_call.1} parent=1 // pred_region
      _
    $region13: #{tpu_custom_call.1} parent=1 // pred_fallthru
      _
    // Predicated region
    $region14: #{tpu_custom_call.1} parent=1 // pred_check
      _
    $region15: #{tpu_custom_call.1} parent=1 // pred_check_branch
      %17 = sbr.rel (0) target = $region17
    $region16: #{tpu_custom_call.1} parent=1 // pred_region
      _
    $region17: #{tpu_custom_call.1} parent=1 // pred_fallthru
      _
    %v18 = vld [vmem:[%s0] sm:$0xff]
    %v19 = vld [vmem:[%s1] sm:$0xff]
    %v20 = vld [vmem:[%s1 + $0x8] sm:$0xff]
    %v21 = vld [vmem:[%s2] sm:$0xff]
    %v22 = vld [vmem:[%s2 + $0x8] sm:$0xff]
    %v23 = vld [vmem:[%s2 + $0x10] sm:$0xff]
    %v24 = vld [vmem:[%s2 + $0x18] sm:$0xff]
    %v25 = vld [vmem:[%s2 + $0x20] sm:$0xff]
    %v26 = vld [vmem:[%s2 + $0x28] sm:$0xff]
    %v27 = vld [vmem:[%s2 + $0x30] sm:$0xff]
    %v28 = vld [vmem:[%s2 + $0x38] sm:$0xff]
    %v29 = vld [vmem:[%s2 + $0x40] sm:$0xff]
    %v30 = vld [vmem:[%s2 + $0x48] sm:$0xff]
    %v31 = vld [vmem:[%s2 + $0x50] sm:$0xff]
    %v32 = vld [vmem:[%s2 + $0x58] sm:$0xff]
    %v33 = vld [vmem:[%s2 + $0x60] sm:$0xff]
    %v34 = vld [vmem:[%s2 + $0x68] sm:$0xff]
    %v35 = vld [vmem:[%s2 + $0x70] sm:$0xff]
    %v36 = vld [vmem:[%s2 + $0x78] sm:$0xff]
    %v37 = vadd.f32 %v21, 1.0
    %v38 = vadd.f32 %v22, 1.0
    %v39 = vadd.f32 %v23, 1.0
    %v40 = vadd.f32 %v24, 1.0
    %v41 = vadd.f32 %v25, 1.0
    %v42 = vadd.f32 %v26, 1.0
    %v43 = vadd.f32 %v27, 1.0
    %v44 = vadd.f32 %v28, 1.0
    %v45 = vadd.f32 %v29, 1.0
    %v46 = vadd.f32 %v30, 1.0
    %v47 = vadd.f32 %v31, 1.0
    %v48 = vadd.f32 %v32, 1.0
    %v49 = vadd.f32 %v33, 1.0
    %v50 = vadd.f32 %v34, 1.0
    %v51 = vadd.f32 %v35, 1.0
    %v52 = vadd.f32 %v36, 1.0
    %v53 = vld [vmem:[%s3] sm:$0xff]
    %v54 = vld [vmem:[%s3 + $0x8] sm:$0xff]
    %v55 = vld [vmem:[%s3 + $0x10] sm:$0xff]
    %v56 = vld [vmem:[%s3 + $0x18] sm:$0xff]
    %v57 = vld [vmem:[%s3 + $0x20] sm:$0xff]
    %v58 = vld [vmem:[%s3 + $0x28] sm:$0xff]
    %v59 = vld [vmem:[%s3 + $0x30] sm:$0xff]
    %v60 = vld [vmem:[%s3 + $0x38] sm:$0xff]
    %v61 = vld [vmem:[%s3 + $0x40] sm:$0xff]
    %v62 = vld [vmem:[%s3 + $0x48] sm:$0xff]
    %v63 = vld [vmem:[%s3 + $0x50] sm:$0xff]
    %v64 = vld [vmem:[%s3 + $0x58] sm:$0xff]
    %v65 = vld [vmem:[%s3 + $0x60] sm:$0xff]
    %v66 = vld [vmem:[%s3 + $0x68] sm:$0xff]
    %v67 = vld [vmem:[%s3 + $0x70] sm:$0xff]
    %v68 = vld [vmem:[%s3 + $0x78] sm:$0xff]
    %v69 = vadd.f32 %v53, 1.0
    %v70 = vadd.f32 %v54, 1.0
    %v71 = vadd.f32 %v55, 1.0
    %v72 = vadd.f32 %v56, 1.0
    %v73 = vadd.f32 %v57, 1.0
    %v74 = vadd.f32 %v58, 1.0
    %v75 = vadd.f32 %v59, 1.0
    %v76 = vadd.f32 %v60, 1.0
    %v77 = vadd.f32 %v61, 1.0
    %v78 = vadd.f32 %v62, 1.0
    %v79 = vadd.f32 %v63, 1.0
    %v80 = vadd.f32 %v64, 1.0
    %v81 = vadd.f32 %v65, 1.0
    %v82 = vadd.f32 %v66, 1.0
    %v83 = vadd.f32 %v67, 1.0
    %v84 = vadd.f32 %v68, 1.0
    %v85 = vmul.f32 %v37, %v37
    %v86 = vmul.f32 %v38, %v38
    %v87 = vmul.f32 %v39, %v39
    %v88 = vmul.f32 %v40, %v40
    %v89 = vmul.f32 %v41, %v41
    %v90 = vmul.f32 %v42, %v42
    %v91 = vmul.f32 %v43, %v43
    %v92 = vmul.f32 %v44, %v44
    %v93 = vmul.f32 %v45, %v45
    %v94 = vmul.f32 %v46, %v46
    %v95 = vmul.f32 %v47, %v47
    %v96 = vmul.f32 %v48, %v48
    %v97 = vmul.f32 %v49, %v49
    %v98 = vmul.f32 %v50, %v50
    %v99 = vmul.f32 %v51, %v51
    %v100 = vmul.f32 %v52, %v52
    %v101 = vmul.f32 %v69, %v69
    %v102 = vmul.f32 %v70, %v70
    %v103 = vmul.f32 %v71, %v71
    %v104 = vmul.f32 %v72, %v72
    %v105 = vmul.f32 %v73, %v73
    %v106 = vmul.f32 %v74, %v74
    %v107 = vmul.f32 %v75, %v75
    %v108 = vmul.f32 %v76, %v76
    %v109 = vmul.f32 %v77, %v77
    %v110 = vmul.f32 %v78, %v78
    %v111 = vmul.f32 %v79, %v79
    %v112 = vmul.f32 %v80, %v80
    %v113 = vmul.f32 %v81, %v81
    %v114 = vmul.f32 %v82, %v82
    %v115 = vmul.f32 %v83, %v83
    %v116 = vmul.f32 %v84, %v84
    %v117 = vmul.f32 %v37, %v69
    %v118 = vmul.f32 %v38, %v70
    %v119 = vmul.f32 %v39, %v71
    %v120 = vmul.f32 %v40, %v72
    %v121 = vmul.f32 %v41, %v73
    %v122 = vmul.f32 %v42, %v74
    %v123 = vmul.f32 %v43, %v75
    %v124 = vmul.f32 %v44, %v76
    %v125 = vmul.f32 %v45, %v77
    %v126 = vmul.f32 %v46, %v78
    %v127 = vmul.f32 %v47, %v79
    %v128 = vmul.f32 %v48, %v80
    %v129 = vmul.f32 %v49, %v81
    %v130 = vmul.f32 %v50, %v82
    %v131 = vmul.f32 %v51, %v83
    %v132 = vmul.f32 %v52, %v84
    %vm133 = vcmask 130048
    %v135 = vsel %vm133, %v37, 0
    %v138 = vsel %vm133, %v38, 0
    %v141 = vsel %vm133, %v39, 0
    %v144 = vsel %vm133, %v40, 0
    %v147 = vsel %vm133, %v41, 0
    %v150 = vsel %vm133, %v42, 0
    %v153 = vsel %vm133, %v43, 0
    %v156 = vsel %vm133, %v44, 0
    %v159 = vsel %vm133, %v45, 0
    %v162 = vsel %vm133, %v46, 0
    %v165 = vsel %vm133, %v47, 0
    %v168 = vsel %vm133, %v48, 0
    %v171 = vsel %vm133, %v49, 0
    %v174 = vsel %vm133, %v50, 0
    %v177 = vsel %vm133, %v51, 0
    %v180 = vsel %vm133, %v52, 0
    %v183 = vsel %vm133, %v69, 0
    %v186 = vsel %vm133, %v70, 0
    %v189 = vsel %vm133, %v71, 0
    %v192 = vsel %vm133, %v72, 0
    %v195 = vsel %vm133, %v73, 0
    %v198 = vsel %vm133, %v74, 0
    %v201 = vsel %vm133, %v75, 0
    %v204 = vsel %vm133, %v76, 0
    %v207 = vsel %vm133, %v77, 0
    %v210 = vsel %vm133, %v78, 0
    %v213 = vsel %vm133, %v79, 0
    %v216 = vsel %vm133, %v80, 0
    %v219 = vsel %vm133, %v81, 0
    %v222 = vsel %vm133, %v82, 0
    %v225 = vsel %vm133, %v83, 0
    %v228 = vsel %vm133, %v84, 0
    %v231 = vsel %vm133, %v85, 0
    %v234 = vsel %vm133, %v86, 0
    %v237 = vsel %vm133, %v87, 0
    %v240 = vsel %vm133, %v88, 0
    %v243 = vsel %vm133, %v89, 0
    %v246 = vsel %vm133, %v90, 0
    %v249 = vsel %vm133, %v91, 0
    %v252 = vsel %vm133, %v92, 0
    %v255 = vsel %vm133, %v93, 0
    %v258 = vsel %vm133, %v94, 0
    %v261 = vsel %vm133, %v95, 0
    %v264 = vsel %vm133, %v96, 0
    %v267 = vsel %vm133, %v97, 0
    %v270 = vsel %vm133, %v98, 0
    %v273 = vsel %vm133, %v99, 0
    %v276 = vsel %vm133, %v100, 0
    %v279 = vsel %vm133, %v101, 0
    %v282 = vsel %vm133, %v102, 0
    %v285 = vsel %vm133, %v103, 0
    %v288 = vsel %vm133, %v104, 0
    %v291 = vsel %vm133, %v105, 0
    %v294 = vsel %vm133, %v106, 0
    %v297 = vsel %vm133, %v107, 0
    %v300 = vsel %vm133, %v108, 0
    %v303 = vsel %vm133, %v109, 0
    %v306 = vsel %vm133, %v110, 0
    %v309 = vsel %vm133, %v111, 0
    %v312 = vsel %vm133, %v112, 0
    %v315 = vsel %vm133, %v113, 0
    %v318 = vsel %vm133, %v114, 0
    %v321 = vsel %vm133, %v115, 0
    %v324 = vsel %vm133, %v116, 0
    %v327 = vsel %vm133, %v117, 0
    %v330 = vsel %vm133, %v118, 0
    %v333 = vsel %vm133, %v119, 0
    %v336 = vsel %vm133, %v120, 0
    %v339 = vsel %vm133, %v121, 0
    %v342 = vsel %vm133, %v122, 0
    %v345 = vsel %vm133, %v123, 0
    %v348 = vsel %vm133, %v124, 0
    %v351 = vsel %vm133, %v125, 0
    %v354 = vsel %vm133, %v126, 0
    %v357 = vsel %vm133, %v127, 0
    %v360 = vsel %vm133, %v128, 0
    %v363 = vsel %vm133, %v129, 0
    %v366 = vsel %vm133, %v130, 0
    %v369 = vsel %vm133, %v131, 0
    %v372 = vsel %vm133, %v132, 0
    %374 = vmatprep.subr.mxu0 0.0
    %375 = vmatpush1.msra.mxu0 %v19
    %376 = vmatprep.subr.mxu0 0.0
    %377 = vmatpush1.msra.mxu0 %v20
    %378 = vmatprep.subr.mxu0 0.0
    %379 = vmatpush1.msra.mxu0 0.0
    %380 = vmatprep.subr.mxu0 0.0
    %381 = vmatpush1.msra.mxu0 0.0
    %382 = vmatprep.subr.mxu0 0.0
    %383 = vmatpush1.msra.mxu0 0.0
    %384 = vmatprep.subr.mxu0 0.0
    %385 = vmatpush1.msra.mxu0 0.0
    %386 = vmatprep.subr.mxu0 0.0
    %387 = vmatpush1.msra.mxu0 0.0
    %388 = vmatprep.subr.mxu0 0.0
    %389 = vmatpush1.msra.mxu0 0.0
    %390 = vmatprep.subr.mxu0 0.0
    %391 = vmatpush1.msra.mxu0 0.0
    %392 = vmatprep.subr.mxu0 0.0
    %393 = vmatpush1.msra.mxu0 0.0
    %394 = vmatprep.subr.mxu0 0.0
    %395 = vmatpush1.msra.mxu0 0.0
    %396 = vmatprep.subr.mxu0 0.0
    %397 = vmatpush1.msra.mxu0 0.0
    %398 = vmatprep.subr.mxu0 0.0
    %399 = vmatpush1.msra.mxu0 0.0
    %400 = vmatprep.subr.mxu0 0.0
    %401 = vmatpush1.msra.mxu0 0.0
    %402 = vmatprep.subr.mxu0 0.0
    %403 = vmatpush1.msra.mxu0 0.0
    %404 = vmatprep.subr.mxu0 0.0
    %405 = vmatpush1.msra.mxu0 0.0
    %406 = vmatprep.subr.mxu0 0.0
    %407 = vmatpush1.msra.mxu0 0.0
    %408 = vmatprep.subr.mxu0 0.0
    %409 = vmatpush1.msra.mxu0 0.0
    %410 = vmatprep.subr.mxu0 0.0
    %411 = vmatpush1.msra.mxu0 0.0
    %412 = vmatprep.subr.mxu0 0.0
    %413 = vmatpush1.msra.mxu0 0.0
    %414 = vmatprep.subr.mxu0 0.0
    %415 = vmatpush1.msra.mxu0 0.0
    %416 = vmatprep.subr.mxu0 0.0
    %417 = vmatpush1.msra.mxu0 0.0
    %418 = vmatprep.subr.mxu0 0.0
    %419 = vmatpush1.msra.mxu0 0.0
    %420 = vmatprep.subr.mxu0 0.0
    %421 = vmatpush1.msra.mxu0 0.0
    %422 = vmatprep.subr.mxu0 0.0
    %423 = vmatpush1.msra.mxu0 0.0
    %424 = vmatprep.subr.mxu0 0.0
    %425 = vmatpush1.msra.mxu0 0.0
    %426 = vmatprep.subr.mxu0 0.0
    %427 = vmatpush1.msra.mxu0 0.0
    %428 = vmatprep.subr.mxu0 0.0
    %429 = vmatpush1.msra.mxu0 0.0
    %430 = vmatprep.subr.mxu0 0.0
    %431 = vmatpush1.msra.mxu0 0.0
    %432 = vmatprep.subr.mxu0 0.0
    %433 = vmatpush1.msra.mxu0 0.0
    %434 = vmatprep.subr.mxu0 0.0
    %435 = vmatpush1.msra.mxu0 0.0
    %436 = vmatprep.subr.mxu0 0.0
    %437 = vmatpush1.msra.mxu0 0.0
    %438 = vmatprep.mubr.f32.mxu0 0.0
    %439 = vmatmul.mubr.f32.gmra.mrb[0].mxu0 %v135
    %v440 = vpop.f32.mrb[0].mxu0
    %v441 = vadd.f32 0.0, %v440
    %v442 = vpop.f32.mrb[0].mxu0
    %443 = vmatprep.mubr.f32.mxu0 0.0
    %444 = vmatmul.mubr.f32.gmra.mrb[0].mxu0 %v138
    %v445 = vpop.f32.mrb[0].mxu0
    %v446 = vadd.f32 0.0, %v445
    %v447 = vpop.f32.mrb[0].mxu0
    %448 = vmatprep.mubr.f32.mxu0 0.0
    %449 = vmatmul.mubr.f32.gmra.mrb[0].mxu0 %v141
    %v450 = vpop.f32.mrb[0].mxu0
    %v451 = vadd.f32 0.0, %v450
    %v452 = vpop.f32.mrb[0].mxu0
    %453 = vmatprep.mubr.f32.mxu0 0.0
    %454 = vmatmul.mubr.f32.gmra.mrb[0].mxu0 %v144
    %v455 = vpop.f32.mrb[0].mxu0
    %v456 = vadd.f32 0.0, %v455
    %v457 = vpop.f32.mrb[0].mxu0
    %458 = vmatprep.mubr.f32.mxu0 0.0
    %459 = vmatmul.mubr.f32.gmra.mrb[0].mxu0 %v147
    %v460 = vpop.f32.mrb[0].mxu0
    %v461 = vadd.f32 0.0, %v460
    %v462 = vpop.f32.mrb[0].mxu0
    %463 = vmatprep.mubr.f32.mxu0 0.0
    %464 = vmatmul.mubr.f32.gmra.mrb[0].mxu0 %v150
    %v465 = vpop.f32.mrb[0].mxu0
    %v466 = vadd.f32 0.0, %v465
    %v467 = vpop.f32.mrb[0].mxu0
    %468 = vmatprep.mubr.f32.mxu0 0.0
    %469 = vmatmul.mubr.f32.gmra.mrb[0].mxu0 %v153
    %v470 = vpop.f32.mrb[0].mxu0
    %v471 = vadd.f32 0.0, %v470
    %v472 = vpop.f32.mrb[0].mxu0
    %473 = vmatprep.mubr.f32.mxu0 0.0
    %474 = vmatmul.mubr.f32.gmra.mrb[0].mxu0 %v156
    %v475 = vpop.f32.mrb[0].mxu0
    %v476 = vadd.f32 0.0, %v475
    %v477 = vpop.f32.mrb[0].mxu0
    %478 = vmatprep.mubr.f32.mxu0 0.0
    %479 = vmatmul.mubr.f32.gmra.mrb[0].mxu0 %v159
    %v480 = vpop.f32.mrb[0].mxu0
    %v481 = vadd.f32 0.0, %v480
    %v482 = vpop.f32.mrb[0].mxu0
    %483 = vmatprep.mubr.f32.mxu0 0.0
    %484 = vmatmul.mubr.f32.gmra.mrb[0].mxu0 %v162
    %v485 = vpop.f32.mrb[0].mxu0
    %v486 = vadd.f32 0.0, %v485
    %v487 = vpop.f32.mrb[0].mxu0
    %488 = vmatprep.mubr.f32.mxu0 0.0
    %489 = vmatmul.mubr.f32.gmra.mrb[0].mxu0 %v165
    %v490 = vpop.f32.mrb[0].mxu0
    %v491 = vadd.f32 0.0, %v490
    %v492 = vpop.f32.mrb[0].mxu0
    %493 = vmatprep.mubr.f32.mxu0 0.0
    %494 = vmatmul.mubr.f32.gmra.mrb[0].mxu0 %v168
    %v495 = vpop.f32.mrb[0].mxu0
    %v496 = vadd.f32 0.0, %v495
    %v497 = vpop.f32.mrb[0].mxu0
    %498 = vmatprep.mubr.f32.mxu0 0.0
    %499 = vmatmul.mubr.f32.gmra.mrb[0].mxu0 %v171
    %v500 = vpop.f32.mrb[0].mxu0
    %v501 = vadd.f32 0.0, %v500
    %v502 = vpop.f32.mrb[0].mxu0
    %503 = vmatprep.mubr.f32.mxu0 0.0
    %504 = vmatmul.mubr.f32.gmra.mrb[0].mxu0 %v174
    %v505 = vpop.f32.mrb[0].mxu0
    %v506 = vadd.f32 0.0, %v505
    %v507 = vpop.f32.mrb[0].mxu0
    %508 = vmatprep.mubr.f32.mxu0 0.0
    %509 = vmatmul.mubr.f32.gmra.mrb[0].mxu0 %v177
    %v510 = vpop.f32.mrb[0].mxu0
    %v511 = vadd.f32 0.0, %v510
    %v512 = vpop.f32.mrb[0].mxu0
    %513 = vmatprep.mubr.f32.mxu0 0.0
    %514 = vmatmul.mubr.f32.gmra.mrb[0].mxu0 %v180
    %v515 = vpop.f32.mrb[0].mxu0
    %v516 = vadd.f32 0.0, %v515
    %v517 = vpop.f32.mrb[0].mxu0
    %518 = vmatprep.mubr.f32.mxu0 0.0
    %519 = vmatmul.mubr.f32.gmra.mrb[0].mxu0 %v183
    %v520 = vpop.f32.mrb[0].mxu0
    %v521 = vadd.f32 0.0, %v520
    %v522 = vpop.f32.mrb[0].mxu0
    %523 = vmatprep.mubr.f32.mxu0 0.0
    %524 = vmatmul.mubr.f32.gmra.mrb[0].mxu0 %v186
    %v525 = vpop.f32.mrb[0].mxu0
    %v526 = vadd.f32 0.0, %v525
    %v527 = vpop.f32.mrb[0].mxu0
    %528 = vmatprep.mubr.f32.mxu0 0.0
    %529 = vmatmul.mubr.f32.gmra.mrb[0].mxu0 %v189
    %v530 = vpop.f32.mrb[0].mxu0
    %v531 = vadd.f32 0.0, %v530
    %v532 = vpop.f32.mrb[0].mxu0
    %533 = vmatprep.mubr.f32.mxu0 0.0
    %534 = vmatmul.mubr.f32.gmra.mrb[0].mxu0 %v192
    %v535 = vpop.f32.mrb[0].mxu0
    %v536 = vadd.f32 0.0, %v535
    %v537 = vpop.f32.mrb[0].mxu0
    %538 = vmatprep.mubr.f32.mxu0 0.0
    %539 = vmatmul.mubr.f32.gmra.mrb[0].mxu0 %v195
    %v540 = vpop.f32.mrb[0].mxu0
    %v541 = vadd.f32 0.0, %v540
    %v542 = vpop.f32.mrb[0].mxu0
    %543 = vmatprep.mubr.f32.mxu0 0.0
    %544 = vmatmul.mubr.f32.gmra.mrb[0].mxu0 %v198
    %v545 = vpop.f32.mrb[0].mxu0
    %v546 = vadd.f32 0.0, %v545
    %v547 = vpop.f32.mrb[0].mxu0
    %548 = vmatprep.mubr.f32.mxu0 0.0
    %549 = vmatmul.mubr.f32.gmra.mrb[0].mxu0 %v201
    %v550 = vpop.f32.mrb[0].mxu0
    %v551 = vadd.f32 0.0, %v550
    %v552 = vpop.f32.mrb[0].mxu0
    %553 = vmatprep.mubr.f32.mxu0 0.0
    %554 = vmatmul.mubr.f32.gmra.mrb[0].mxu0 %v204
    %v555 = vpop.f32.mrb[0].mxu0
    %v556 = vadd.f32 0.0, %v555
    %v557 = vpop.f32.mrb[0].mxu0
    %558 = vmatprep.mubr.f32.mxu0 0.0
    %559 = vmatmul.mubr.f32.gmra.mrb[0].mxu0 %v207
    %v560 = vpop.f32.mrb[0].mxu0
    %v561 = vadd.f32 0.0, %v560
    %v562 = vpop.f32.mrb[0].mxu0
    %563 = vmatprep.mubr.f32.mxu0 0.0
    %564 = vmatmul.mubr.f32.gmra.mrb[0].mxu0 %v210
    %v565 = vpop.f32.mrb[0].mxu0
    %v566 = vadd.f32 0.0, %v565
    %v567 = vpop.f32.mrb[0].mxu0
    %568 = vmatprep.mubr.f32.mxu0 0.0
    %569 = vmatmul.mubr.f32.gmra.mrb[0].mxu0 %v213
    %v570 = vpop.f32.mrb[0].mxu0
    %v571 = vadd.f32 0.0, %v570
    %v572 = vpop.f32.mrb[0].mxu0
    %573 = vmatprep.mubr.f32.mxu0 0.0
    %574 = vmatmul.mubr.f32.gmra.mrb[0].mxu0 %v216
    %v575 = vpop.f32.mrb[0].mxu0
    %v576 = vadd.f32 0.0, %v575
    %v577 = vpop.f32.mrb[0].mxu0
    %578 = vmatprep.mubr.f32.mxu0 0.0
    %579 = vmatmul.mubr.f32.gmra.mrb[0].mxu0 %v219
    %v580 = vpop.f32.mrb[0].mxu0
    %v581 = vadd.f32 0.0, %v580
    %v582 = vpop.f32.mrb[0].mxu0
    %583 = vmatprep.mubr.f32.mxu0 0.0
    %584 = vmatmul.mubr.f32.gmra.mrb[0].mxu0 %v222
    %v585 = vpop.f32.mrb[0].mxu0
    %v586 = vadd.f32 0.0, %v585
    %v587 = vpop.f32.mrb[0].mxu0
    %588 = vmatprep.mubr.f32.mxu0 0.0
    %589 = vmatmul.mubr.f32.gmra.mrb[0].mxu0 %v225
    %v590 = vpop.f32.mrb[0].mxu0
    %v591 = vadd.f32 0.0, %v590
    %v592 = vpop.f32.mrb[0].mxu0
    %593 = vmatprep.mubr.f32.mxu0 0.0
    %594 = vmatmul.mubr.f32.gmra.mrb[0].mxu0 %v228
    %v595 = vpop.f32.mrb[0].mxu0
    %v596 = vadd.f32 0.0, %v595
    %v597 = vpop.f32.mrb[0].mxu0
    %598 = vmatprep.mubr.f32.mxu0 0.0
    %599 = vmatmul.mubr.f32.gmra.mrb[0].mxu0 %v231
    %v600 = vpop.f32.mrb[0].mxu0
    %v601 = vadd.f32 0.0, %v600
    %v602 = vpop.f32.mrb[0].mxu0
    %603 = vmatprep.mubr.f32.mxu0 0.0
    %604 = vmatmul.mubr.f32.gmra.mrb[0].mxu0 %v234
    %v605 = vpop.f32.mrb[0].mxu0
    %v606 = vadd.f32 0.0, %v605
    %v607 = vpop.f32.mrb[0].mxu0
    %608 = vmatprep.mubr.f32.mxu0 0.0
    %609 = vmatmul.mubr.f32.gmra.mrb[0].mxu0 %v237
    %v610 = vpop.f32.mrb[0].mxu0
    %v611 = vadd.f32 0.0, %v610
    %v612 = vpop.f32.mrb[0].mxu0
    %613 = vmatprep.mubr.f32.mxu0 0.0
    %614 = vmatmul.mubr.f32.gmra.mrb[0].mxu0 %v240
    %v615 = vpop.f32.mrb[0].mxu0
    %v616 = vadd.f32 0.0, %v615
    %v617 = vpop.f32.mrb[0].mxu0
    %618 = vmatprep.mubr.f32.mxu0 0.0
    %619 = vmatmul.mubr.f32.gmra.mrb[0].mxu0 %v243
    %v620 = vpop.f32.mrb[0].mxu0
    %v621 = vadd.f32 0.0, %v620
    %v622 = vpop.f32.mrb[0].mxu0
    %623 = vmatprep.mubr.f32.mxu0 0.0
    %624 = vmatmul.mubr.f32.gmra.mrb[0].mxu0 %v246
    %v625 = vpop.f32.mrb[0].mxu0
    %v626 = vadd.f32 0.0, %v625
    %v627 = vpop.f32.mrb[0].mxu0
    %628 = vmatprep.mubr.f32.mxu0 0.0
    %629 = vmatmul.mubr.f32.gmra.mrb[0].mxu0 %v249
    %v630 = vpop.f32.mrb[0].mxu0
    %v631 = vadd.f32 0.0, %v630
    %v632 = vpop.f32.mrb[0].mxu0
    %633 = vmatprep.mubr.f32.mxu0 0.0
    %634 = vmatmul.mubr.f32.gmra.mrb[0].mxu0 %v252
    %v635 = vpop.f32.mrb[0].mxu0
    %v636 = vadd.f32 0.0, %v635
    %v637 = vpop.f32.mrb[0].mxu0
    %638 = vmatprep.mubr.f32.mxu0 0.0
    %639 = vmatmul.mubr.f32.gmra.mrb[0].mxu0 %v255
    %v640 = vpop.f32.mrb[0].mxu0
    %v641 = vadd.f32 0.0, %v640
    %v642 = vpop.f32.mrb[0].mxu0
    %643 = vmatprep.mubr.f32.mxu0 0.0
    %644 = vmatmul.mubr.f32.gmra.mrb[0].mxu0 %v258
    %v645 = vpop.f32.mrb[0].mxu0
    %v646 = vadd.f32 0.0, %v645
    %v647 = vpop.f32.mrb[0].mxu0
    %648 = vmatprep.mubr.f32.mxu0 0.0
    %649 = vmatmul.mubr.f32.gmra.mrb[0].mxu0 %v261
    %v650 = vpop.f32.mrb[0].mxu0
    %v651 = vadd.f32 0.0, %v650
    %v652 = vpop.f32.mrb[0].mxu0
    %653 = vmatprep.mubr.f32.mxu0 0.0
    %654 = vmatmul.mubr.f32.gmra.mrb[0].mxu0 %v264
    %v655 = vpop.f32.mrb[0].mxu0
    %v656 = vadd.f32 0.0, %v655
    %v657 = vpop.f32.mrb[0].mxu0
    %658 = vmatprep.mubr.f32.mxu0 0.0
    %659 = vmatmul.mubr.f32.gmra.mrb[0].mxu0 %v267
    %v660 = vpop.f32.mrb[0].mxu0
    %v661 = vadd.f32 0.0, %v660
    %v662 = vpop.f32.mrb[0].mxu0
    %663 = vmatprep.mubr.f32.mxu0 0.0
    %664 = vmatmul.mubr.f32.gmra.mrb[0].mxu0 %v270
    %v665 = vpop.f32.mrb[0].mxu0
    %v666 = vadd.f32 0.0, %v665
    %v667 = vpop.f32.mrb[0].mxu0
    %668 = vmatprep.mubr.f32.mxu0 0.0
    %669 = vmatmul.mubr.f32.gmra.mrb[0].mxu0 %v273
    %v670 = vpop.f32.mrb[0].mxu0
    %v671 = vadd.f32 0.0, %v670
    %v672 = vpop.f32.mrb[0].mxu0
    %673 = vmatprep.mubr.f32.mxu0 0.0
    %674 = vmatmul.mubr.f32.gmra.mrb[0].mxu0 %v276
    %v675 = vpop.f32.mrb[0].mxu0
    %v676 = vadd.f32 0.0, %v675
    %v677 = vpop.f32.mrb[0].mxu0
    %678 = vmatprep.mubr.f32.mxu0 0.0
    %679 = vmatmul.mubr.f32.gmra.mrb[0].mxu0 %v279
    %v680 = vpop.f32.mrb[0].mxu0
    %v681 = vadd.f32 0.0, %v680
    %v682 = vpop.f32.mrb[0].mxu0
    %683 = vmatprep.mubr.f32.mxu0 0.0
    %684 = vmatmul.mubr.f32.gmra.mrb[0].mxu0 %v282
    %v685 = vpop.f32.mrb[0].mxu0
    %v686 = vadd.f32 0.0, %v685
    %v687 = vpop.f32.mrb[0].mxu0
    %688 = vmatprep.mubr.f32.mxu0 0.0
    %689 = vmatmul.mubr.f32.gmra.mrb[0].mxu0 %v285
    %v690 = vpop.f32.mrb[0].mxu0
    %v691 = vadd.f32 0.0, %v690
    %v692 = vpop.f32.mrb[0].mxu0
    %693 = vmatprep.mubr.f32.mxu0 0.0
    %694 = vmatmul.mubr.f32.gmra.mrb[0].mxu0 %v288
    %v695 = vpop.f32.mrb[0].mxu0
    %v696 = vadd.f32 0.0, %v695
    %v697 = vpop.f32.mrb[0].mxu0
    %698 = vmatprep.mubr.f32.mxu0 0.0
    %699 = vmatmul.mubr.f32.gmra.mrb[0].mxu0 %v291
    %v700 = vpop.f32.mrb[0].mxu0
    %v701 = vadd.f32 0.0, %v700
    %v702 = vpop.f32.mrb[0].mxu0
    %703 = vmatprep.mubr.f32.mxu0 0.0
    %704 = vmatmul.mubr.f32.gmra.mrb[0].mxu0 %v294
    %v705 = vpop.f32.mrb[0].mxu0
    %v706 = vadd.f32 0.0, %v705
    %v707 = vpop.f32.mrb[0].mxu0
    %708 = vmatprep.mubr.f32.mxu0 0.0
    %709 = vmatmul.mubr.f32.gmra.mrb[0].mxu0 %v297
    %v710 = vpop.f32.mrb[0].mxu0
    %v711 = vadd.f32 0.0, %v710
    %v712 = vpop.f32.mrb[0].mxu0
    %713 = vmatprep.mubr.f32.mxu0 0.0
    %714 = vmatmul.mubr.f32.gmra.mrb[0].mxu0 %v300
    %v715 = vpop.f32.mrb[0].mxu0
    %v716 = vadd.f32 0.0, %v715
    %v717 = vpop.f32.mrb[0].mxu0
    %718 = vmatprep.mubr.f32.mxu0 0.0
    %719 = vmatmul.mubr.f32.gmra.mrb[0].mxu0 %v303
    %v720 = vpop.f32.mrb[0].mxu0
    %v721 = vadd.f32 0.0, %v720
    %v722 = vpop.f32.mrb[0].mxu0
    %723 = vmatprep.mubr.f32.mxu0 0.0
    %724 = vmatmul.mubr.f32.gmra.mrb[0].mxu0 %v306
    %v725 = vpop.f32.mrb[0].mxu0
    %v726 = vadd.f32 0.0, %v725
    %v727 = vpop.f32.mrb[0].mxu0
    %728 = vmatprep.mubr.f32.mxu0 0.0
    %729 = vmatmul.mubr.f32.gmra.mrb[0].mxu0 %v309
    %v730 = vpop.f32.mrb[0].mxu0
    %v731 = vadd.f32 0.0, %v730
    %v732 = vpop.f32.mrb[0].mxu0
    %733 = vmatprep.mubr.f32.mxu0 0.0
    %734 = vmatmul.mubr.f32.gmra.mrb[0].mxu0 %v312
    %v735 = vpop.f32.mrb[0].mxu0
    %v736 = vadd.f32 0.0, %v735
    %v737 = vpop.f32.mrb[0].mxu0
    %738 = vmatprep.mubr.f32.mxu0 0.0
    %739 = vmatmul.mubr.f32.gmra.mrb[0].mxu0 %v315
    %v740 = vpop.f32.mrb[0].mxu0
    %v741 = vadd.f32 0.0, %v740
    %v742 = vpop.f32.mrb[0].mxu0
    %743 = vmatprep.mubr.f32.mxu0 0.0
    %744 = vmatmul.mubr.f32.gmra.mrb[0].mxu0 %v318
    %v745 = vpop.f32.mrb[0].mxu0
    %v746 = vadd.f32 0.0, %v745
    %v747 = vpop.f32.mrb[0].mxu0
    %748 = vmatprep.mubr.f32.mxu0 0.0
    %749 = vmatmul.mubr.f32.gmra.mrb[0].mxu0 %v321
    %v750 = vpop.f32.mrb[0].mxu0
    %v751 = vadd.f32 0.0, %v750
    %v752 = vpop.f32.mrb[0].mxu0
    %753 = vmatprep.mubr.f32.mxu0 0.0
    %754 = vmatmul.mubr.f32.gmra.mrb[0].mxu0 %v324
    %v755 = vpop.f32.mrb[0].mxu0
    %v756 = vadd.f32 0.0, %v755
    %v757 = vpop.f32.mrb[0].mxu0
    %758 = vmatprep.mubr.f32.mxu0 0.0
    %759 = vmatmul.mubr.f32.gmra.mrb[0].mxu0 %v327
    %v760 = vpop.f32.mrb[0].mxu0
    %v761 = vadd.f32 0.0, %v760
    %v762 = vpop.f32.mrb[0].mxu0
    %763 = vmatprep.mubr.f32.mxu0 0.0
    %764 = vmatmul.mubr.f32.gmra.mrb[0].mxu0 %v330
    %v765 = vpop.f32.mrb[0].mxu0
    %v766 = vadd.f32 0.0, %v765
    %v767 = vpop.f32.mrb[0].mxu0
    %768 = vmatprep.mubr.f32.mxu0 0.0
    %769 = vmatmul.mubr.f32.gmra.mrb[0].mxu0 %v333
    %v770 = vpop.f32.mrb[0].mxu0
    %v771 = vadd.f32 0.0, %v770
    %v772 = vpop.f32.mrb[0].mxu0
    %773 = vmatprep.mubr.f32.mxu0 0.0
    %774 = vmatmul.mubr.f32.gmra.mrb[0].mxu0 %v336
    %v775 = vpop.f32.mrb[0].mxu0
    %v776 = vadd.f32 0.0, %v775
    %v777 = vpop.f32.mrb[0].mxu0
    %778 = vmatprep.mubr.f32.mxu0 0.0
    %779 = vmatmul.mubr.f32.gmra.mrb[0].mxu0 %v339
    %v780 = vpop.f32.mrb[0].mxu0
    %v781 = vadd.f32 0.0, %v780
    %v782 = vpop.f32.mrb[0].mxu0
    %783 = vmatprep.mubr.f32.mxu0 0.0
    %784 = vmatmul.mubr.f32.gmra.mrb[0].mxu0 %v342
    %v785 = vpop.f32.mrb[0].mxu0
    %v786 = vadd.f32 0.0, %v785
    %v787 = vpop.f32.mrb[0].mxu0
    %788 = vmatprep.mubr.f32.mxu0 0.0
    %789 = vmatmul.mubr.f32.gmra.mrb[0].mxu0 %v345
    %v790 = vpop.f32.mrb[0].mxu0
    %v791 = vadd.f32 0.0, %v790
    %v792 = vpop.f32.mrb[0].mxu0
    %793 = vmatprep.mubr.f32.mxu0 0.0
    %794 = vmatmul.mubr.f32.gmra.mrb[0].mxu0 %v348
    %v795 = vpop.f32.mrb[0].mxu0
    %v796 = vadd.f32 0.0, %v795
    %v797 = vpop.f32.mrb[0].mxu0
    %798 = vmatprep.mubr.f32.mxu0 0.0
    %799 = vmatmul.mubr.f32.gmra.mrb[0].mxu0 %v351
    %v800 = vpop.f32.mrb[0].mxu0
    %v801 = vadd.f32 0.0, %v800
    %v802 = vpop.f32.mrb[0].mxu0
    %803 = vmatprep.mubr.f32.mxu0 0.0
    %804 = vmatmul.mubr.f32.gmra.mrb[0].mxu0 %v354
    %v805 = vpop.f32.mrb[0].mxu0
    %v806 = vadd.f32 0.0, %v805
    %v807 = vpop.f32.mrb[0].mxu0
    %808 = vmatprep.mubr.f32.mxu0 0.0
    %809 = vmatmul.mubr.f32.gmra.mrb[0].mxu0 %v357
    %v810 = vpop.f32.mrb[0].mxu0
    %v811 = vadd.f32 0.0, %v810
    %v812 = vpop.f32.mrb[0].mxu0
    %813 = vmatprep.mubr.f32.mxu0 0.0
    %814 = vmatmul.mubr.f32.gmra.mrb[0].mxu0 %v360
    %v815 = vpop.f32.mrb[0].mxu0
    %v816 = vadd.f32 0.0, %v815
    %v817 = vpop.f32.mrb[0].mxu0
    %818 = vmatprep.mubr.f32.mxu0 0.0
    %819 = vmatmul.mubr.f32.gmra.mrb[0].mxu0 %v363
    %v820 = vpop.f32.mrb[0].mxu0
    %v821 = vadd.f32 0.0, %v820
    %v822 = vpop.f32.mrb[0].mxu0
    %823 = vmatprep.mubr.f32.mxu0 0.0
    %824 = vmatmul.mubr.f32.gmra.mrb[0].mxu0 %v366
    %v825 = vpop.f32.mrb[0].mxu0
    %v826 = vadd.f32 0.0, %v825
    %v827 = vpop.f32.mrb[0].mxu0
    %828 = vmatprep.mubr.f32.mxu0 0.0
    %829 = vmatmul.mubr.f32.gmra.mrb[0].mxu0 %v369
    %v830 = vpop.f32.mrb[0].mxu0
    %v831 = vadd.f32 0.0, %v830
    %v832 = vpop.f32.mrb[0].mxu0
    %833 = vmatprep.mubr.f32.mxu0 0.0
    %834 = vmatmul.mubr.f32.gmra.mrb[0].mxu0 %v372
    %v835 = vpop.f32.mrb[0].mxu0
    %v836 = vadd.f32 0.0, %v835
    %v837 = vpop.f32.mrb[0].mxu0
    %838 = vdwg.mxu0
    %839 = vst [vmem:[#allocation2] sm:$0xff] %v441
    %840 = vst [vmem:[#allocation2 + $0x8] sm:$0xff] %v446
    %841 = vst [vmem:[#allocation2 + $0x10] sm:$0xff] %v451
    %842 = vst [vmem:[#allocation2 + $0x18] sm:$0xff] %v456
    %843 = vst [vmem:[#allocation2 + $0x20] sm:$0xff] %v461
    %844 = vst [vmem:[#allocation2 + $0x28] sm:$0xff] %v466
    %845 = vst [vmem:[#allocation2 + $0x30] sm:$0xff] %v471
    %846 = vst [vmem:[#allocation2 + $0x38] sm:$0xff] %v476
    %847 = vst [vmem:[#allocation2 + $0x40] sm:$0xff] %v481
    %848 = vst [vmem:[#allocation2 + $0x48] sm:$0xff] %v486
    %849 = vst [vmem:[#allocation2 + $0x50] sm:$0xff] %v491
    %850 = vst [vmem:[#allocation2 + $0x58] sm:$0xff] %v496
    %851 = vst [vmem:[#allocation2 + $0x60] sm:$0xff] %v501
    %852 = vst [vmem:[#allocation2 + $0x68] sm:$0xff] %v506
    %853 = vst [vmem:[#allocation2 + $0x70] sm:$0xff] %v511
    %854 = vst [vmem:[#allocation2 + $0x78] sm:$0xff] %v516
    %855 = vst [vmem:[#allocation2 + $0x80] sm:$0xff] %v521
    %856 = vst [vmem:[#allocation2 + $0x88] sm:$0xff] %v526
    %857 = vst [vmem:[#allocation2 + $0x90] sm:$0xff] %v531
    %858 = vst [vmem:[#allocation2 + $0x98] sm:$0xff] %v536
    %859 = vst [vmem:[#allocation2 + $0xa0] sm:$0xff] %v541
    %860 = vst [vmem:[#allocation2 + $0xa8] sm:$0xff] %v546
    %861 = vst [vmem:[#allocation2 + $0xb0] sm:$0xff] %v551
    %862 = vst [vmem:[#allocation2 + $0xb8] sm:$0xff] %v556
    %863 = vst [vmem:[#allocation2 + $0xc0] sm:$0xff] %v561
    %864 = vst [vmem:[#allocation2 + $0xc8] sm:$0xff] %v566
    %865 = vst [vmem:[#allocation2 + $0xd0] sm:$0xff] %v571
    %866 = vst [vmem:[#allocation2 + $0xd8] sm:$0xff] %v576
    %867 = vst [vmem:[#allocation2 + $0xe0] sm:$0xff] %v581
    %868 = vst [vmem:[#allocation2 + $0xe8] sm:$0xff] %v586
    %869 = vst [vmem:[#allocation2 + $0xf0] sm:$0xff] %v591
    %870 = vst [vmem:[#allocation2 + $0xf8] sm:$0xff] %v596
    %871 = vst [vmem:[#allocation2 + $0x100] sm:$0xff] %v601
    %872 = vst [vmem:[#allocation2 + $0x108] sm:$0xff] %v606
    %873 = vst [vmem:[#allocation2 + $0x110] sm:$0xff] %v611
    %874 = vst [vmem:[#allocation2 + $0x118] sm:$0xff] %v616
    %875 = vst [vmem:[#allocation2 + $0x120] sm:$0xff] %v621
    %876 = vst [vmem:[#allocation2 + $0x128] sm:$0xff] %v626
    %877 = vst [vmem:[#allocation2 + $0x130] sm:$0xff] %v631
    %878 = vst [vmem:[#allocation2 + $0x138] sm:$0xff] %v636
    %879 = vst [vmem:[#allocation2 + $0x140] sm:$0xff] %v641
    %880 = vst [vmem:[#allocation2 + $0x148] sm:$0xff] %v646
    %881 = vst [vmem:[#allocation2 + $0x150] sm:$0xff] %v651
    %882 = vst [vmem:[#allocation2 + $0x158] sm:$0xff] %v656
    %883 = vst [vmem:[#allocation2 + $0x160] sm:$0xff] %v661
    %884 = vst [vmem:[#allocation2 + $0x168] sm:$0xff] %v666
    %885 = vst [vmem:[#allocation2 + $0x170] sm:$0xff] %v671
    %886 = vst [vmem:[#allocation2 + $0x178] sm:$0xff] %v676
    %887 = vst [vmem:[#allocation2 + $0x180] sm:$0xff] %v681
    %888 = vst [vmem:[#allocation2 + $0x188] sm:$0xff] %v686
    %889 = vst [vmem:[#allocation2 + $0x190] sm:$0xff] %v691
    %890 = vst [vmem:[#allocation2 + $0x198] sm:$0xff] %v696
    %891 = vst [vmem:[#allocation2 + $0x1a0] sm:$0xff] %v701
    %892 = vst [vmem:[#allocation2 + $0x1a8] sm:$0xff] %v706
    %893 = vst [vmem:[#allocation2 + $0x1b0] sm:$0xff] %v711
    %894 = vst [vmem:[#allocation2 + $0x1b8] sm:$0xff] %v716
    %895 = vst [vmem:[#allocation2 + $0x1c0] sm:$0xff] %v721
    %896 = vst [vmem:[#allocation2 + $0x1c8] sm:$0xff] %v726
    %897 = vst [vmem:[#allocation2 + $0x1d0] sm:$0xff] %v731
    %898 = vst [vmem:[#allocation2 + $0x1d8] sm:$0xff] %v736
    %899 = vst [vmem:[#allocation2 + $0x1e0] sm:$0xff] %v741
    %900 = vst [vmem:[#allocation2 + $0x1e8] sm:$0xff] %v746
    %901 = vst [vmem:[#allocation2 + $0x1f0] sm:$0xff] %v751
    %902 = vst [vmem:[#allocation2 + $0x1f8] sm:$0xff] %v756
    %903 = vst [vmem:[#allocation2 + $0x200] sm:$0xff] %v761
    %904 = vst [vmem:[#allocation2 + $0x208] sm:$0xff] %v766
    %905 = vst [vmem:[#allocation2 + $0x210] sm:$0xff] %v771
    %906 = vst [vmem:[#allocation2 + $0x218] sm:$0xff] %v776
    %907 = vst [vmem:[#allocation2 + $0x220] sm:$0xff] %v781
    %908 = vst [vmem:[#allocation2 + $0x228] sm:$0xff] %v786
    %909 = vst [vmem:[#allocation2 + $0x230] sm:$0xff] %v791
    %910 = vst [vmem:[#allocation2 + $0x238] sm:$0xff] %v796
    %911 = vst [vmem:[#allocation2 + $0x240] sm:$0xff] %v801
    %912 = vst [vmem:[#allocation2 + $0x248] sm:$0xff] %v806
    %913 = vst [vmem:[#allocation2 + $0x250] sm:$0xff] %v811
    %914 = vst [vmem:[#allocation2 + $0x258] sm:$0xff] %v816
    %915 = vst [vmem:[#allocation2 + $0x260] sm:$0xff] %v821
    %916 = vst [vmem:[#allocation2 + $0x268] sm:$0xff] %v826
    %917 = vst [vmem:[#allocation2 + $0x270] sm:$0xff] %v831
    %918 = vst [vmem:[#allocation2 + $0x278] sm:$0xff] %v836
    %v919 = vlaneseq
    %v920 = vshrl.u32 %v919, 7
    %v921 = vlaneseq
    %v922 = vand.u32 %v921, 127
    %vm923 = vcmp.lt.s32.totalorder %v920, 6
    %vm924 = vcmp.lt.s32.totalorder %v922, 6
    %vm925 = vmand %vm923, %vm924
    loop: start=0, step=1, limit=8
    $region18: #{tpu_custom_call.1} parent=1 // loop_pre_header
      _
    $region19: #{tpu_custom_call.1} parent=1 // loop_header
      %s927 = sphi 0, %s931
      %p928 = scmp.ge.s32.totalorder %s927, 8
      %v932 = vphi 0.0, %v1329
    $region20: #{tpu_custom_call.1} parent=1 // loop_header_branch
      %930 = sbr.rel (%p928) target = $region24
    $region21: #{tpu_custom_call.1} parent=1 // loop_body
      %s933 = smul.u32 %s927, 16
      %s934 = scalar_lea.vmem [#allocation2], %s933
      %v935 = vld [vmem:[%s934] sm:$0xff]
      %v936 = vld [vmem:[%s934 + $0x8] sm:$0xff]
      %v938 = vsel %vm133, %v18, 0
      %940 = vmatprep.subr.mxu0 0.0
      %941 = vmatpush1.msra.mxu0 %v935
      %942 = vmatprep.subr.mxu0 0.0
      %943 = vmatpush1.msra.mxu0 %v936
      %944 = vmatprep.subr.mxu0 0.0
      %945 = vmatpush1.msra.mxu0 0.0
      %946 = vmatprep.subr.mxu0 0.0
      %947 = vmatpush1.msra.mxu0 0.0
      %948 = vmatprep.subr.mxu0 0.0
      %949 = vmatpush1.msra.mxu0 0.0
      %950 = vmatprep.subr.mxu0 0.0
      %951 = vmatpush1.msra.mxu0 0.0
      %952 = vmatprep.subr.mxu0 0.0
      %953 = vmatpush1.msra.mxu0 0.0
      %954 = vmatprep.subr.mxu0 0.0
      %955 = vmatpush1.msra.mxu0 0.0
      %956 = vmatprep.subr.mxu0 0.0
      %957 = vmatpush1.msra.mxu0 0.0
      %958 = vmatprep.subr.mxu0 0.0
      %959 = vmatpush1.msra.mxu0 0.0
      %960 = vmatprep.subr.mxu0 0.0
      %961 = vmatpush1.msra.mxu0 0.0
      %962 = vmatprep.subr.mxu0 0.0
      %963 = vmatpush1.msra.mxu0 0.0
      %964 = vmatprep.subr.mxu0 0.0
      %965 = vmatpush1.msra.mxu0 0.0
      %966 = vmatprep.subr.mxu0 0.0
      %967 = vmatpush1.msra.mxu0 0.0
      %968 = vmatprep.subr.mxu0 0.0
      %969 = vmatpush1.msra.mxu0 0.0
      %970 = vmatprep.subr.mxu0 0.0
      %971 = vmatpush1.msra.mxu0 0.0
      %972 = vmatprep.subr.mxu0 0.0
      %973 = vmatpush1.msra.mxu0 0.0
      %974 = vmatprep.subr.mxu0 0.0
      %975 = vmatpush1.msra.mxu0 0.0
      %976 = vmatprep.subr.mxu0 0.0
      %977 = vmatpush1.msra.mxu0 0.0
      %978 = vmatprep.subr.mxu0 0.0
      %979 = vmatpush1.msra.mxu0 0.0
      %980 = vmatprep.subr.mxu0 0.0
      %981 = vmatpush1.msra.mxu0 0.0
      %982 = vmatprep.subr.mxu0 0.0
      %983 = vmatpush1.msra.mxu0 0.0
      %984 = vmatprep.subr.mxu0 0.0
      %985 = vmatpush1.msra.mxu0 0.0
      %986 = vmatprep.subr.mxu0 0.0
      %987 = vmatpush1.msra.mxu0 0.0
      %988 = vmatprep.subr.mxu0 0.0
      %989 = vmatpush1.msra.mxu0 0.0
      %990 = vmatprep.subr.mxu0 0.0
      %991 = vmatpush1.msra.mxu0 0.0
      %992 = vmatprep.subr.mxu0 0.0
      %993 = vmatpush1.msra.mxu0 0.0
      %994 = vmatprep.subr.mxu0 0.0
      %995 = vmatpush1.msra.mxu0 0.0
      %996 = vmatprep.subr.mxu0 0.0
      %997 = vmatpush1.msra.mxu0 0.0
      %998 = vmatprep.subr.mxu0 0.0
      %999 = vmatpush1.msra.mxu0 0.0
      %1000 = vmatprep.subr.mxu0 0.0
      %1001 = vmatpush1.msra.mxu0 0.0
      %1002 = vmatprep.subr.mxu0 0.0
      %1003 = vmatpush1.msra.mxu0 0.0
      %1004 = vmatprep.mubr.f32.mxu0 0.0
      %1005 = vmatmul.mubr.f32.gmra.mrb[0].mxu0 %v938
      %v1006 = vpop.f32.mrb[0].mxu0
      %v1007 = vadd.f32 0.0, %v1006
      %v1008 = vpop.f32.mrb[0].mxu0
      %1009 = vdwg.mxu0
      %s1010 = sadd.s32 %s927, 8
      %s1011 = smul.u32 %s1010, 16
      %s1012 = scalar_lea.vmem [#allocation2], %s1011
      %v1013 = vld [vmem:[%s1012] sm:$0xff]
      %v1014 = vld [vmem:[%s1012 + $0x8] sm:$0xff]
      %1015 = vmatprep.subr.mxu0 0.0
      %1016 = vmatpush1.msra.mxu0 %v1013
      %1017 = vmatprep.subr.mxu0 0.0
      %1018 = vmatpush1.msra.mxu0 %v1014
      %1019 = vmatprep.subr.mxu0 0.0
      %1020 = vmatpush1.msra.mxu0 0.0
      %1021 = vmatprep.subr.mxu0 0.0
      %1022 = vmatpush1.msra.mxu0 0.0
      %1023 = vmatprep.subr.mxu0 0.0
      %1024 = vmatpush1.msra.mxu0 0.0
      %1025 = vmatprep.subr.mxu0 0.0
      %1026 = vmatpush1.msra.mxu0 0.0
      %1027 = vmatprep.subr.mxu0 0.0
      %1028 = vmatpush1.msra.mxu0 0.0
      %1029 = vmatprep.subr.mxu0 0.0
      %1030 = vmatpush1.msra.mxu0 0.0
      %1031 = vmatprep.subr.mxu0 0.0
      %1032 = vmatpush1.msra.mxu0 0.0
      %1033 = vmatprep.subr.mxu0 0.0
      %1034 = vmatpush1.msra.mxu0 0.0
      %1035 = vmatprep.subr.mxu0 0.0
      %1036 = vmatpush1.msra.mxu0 0.0
      %1037 = vmatprep.subr.mxu0 0.0
      %1038 = vmatpush1.msra.mxu0 0.0
      %1039 = vmatprep.subr.mxu0 0.0
      %1040 = vmatpush1.msra.mxu0 0.0
      %1041 = vmatprep.subr.mxu0 0.0
      %1042 = vmatpush1.msra.mxu0 0.0
      %1043 = vmatprep.subr.mxu0 0.0
      %1044 = vmatpush1.msra.mxu0 0.0
      %1045 = vmatprep.subr.mxu0 0.0
      %1046 = vmatpush1.msra.mxu0 0.0
      %1047 = vmatprep.subr.mxu0 0.0
      %1048 = vmatpush1.msra.mxu0 0.0
      %1049 = vmatprep.subr.mxu0 0.0
      %1050 = vmatpush1.msra.mxu0 0.0
      %1051 = vmatprep.subr.mxu0 0.0
      %1052 = vmatpush1.msra.mxu0 0.0
      %1053 = vmatprep.subr.mxu0 0.0
      %1054 = vmatpush1.msra.mxu0 0.0
      %1055 = vmatprep.subr.mxu0 0.0
      %1056 = vmatpush1.msra.mxu0 0.0
      %1057 = vmatprep.subr.mxu0 0.0
      %1058 = vmatpush1.msra.mxu0 0.0
      %1059 = vmatprep.subr.mxu0 0.0
      %1060 = vmatpush1.msra.mxu0 0.0
      %1061 = vmatprep.subr.mxu0 0.0
      %1062 = vmatpush1.msra.mxu0 0.0
      %1063 = vmatprep.subr.mxu0 0.0
      %1064 = vmatpush1.msra.mxu0 0.0
      %1065 = vmatprep.subr.mxu0 0.0
      %1066 = vmatpush1.msra.mxu0 0.0
      %1067 = vmatprep.subr.mxu0 0.0
      %1068 = vmatpush1.msra.mxu0 0.0
      %1069 = vmatprep.subr.mxu0 0.0
      %1070 = vmatpush1.msra.mxu0 0.0
      %1071 = vmatprep.subr.mxu0 0.0
      %1072 = vmatpush1.msra.mxu0 0.0
      %1073 = vmatprep.subr.mxu0 0.0
      %1074 = vmatpush1.msra.mxu0 0.0
      %1075 = vmatprep.subr.mxu0 0.0
      %1076 = vmatpush1.msra.mxu0 0.0
      %1077 = vmatprep.subr.mxu0 0.0
      %1078 = vmatpush1.msra.mxu0 0.0
      %1079 = vmatprep.mubr.f32.mxu0 0.0
      %1080 = vmatmul.mubr.f32.gmra.mrb[0].mxu0 %v938
      %v1081 = vpop.f32.mrb[0].mxu0
      %v1082 = vadd.f32 0.0, %v1081
      %v1083 = vpop.f32.mrb[0].mxu0
      %1084 = vdwg.mxu0
      %s1085 = sadd.s32 %s927, 16
      %s1086 = smul.u32 %s1085, 16
      %s1087 = scalar_lea.vmem [#allocation2], %s1086
      %v1088 = vld [vmem:[%s1087] sm:$0xff]
      %v1089 = vld [vmem:[%s1087 + $0x8] sm:$0xff]
      %1090 = vmatprep.subr.mxu0 0.0
      %1091 = vmatpush1.msra.mxu0 %v1088
      %1092 = vmatprep.subr.mxu0 0.0
      %1093 = vmatpush1.msra.mxu0 %v1089
      %1094 = vmatprep.subr.mxu0 0.0
      %1095 = vmatpush1.msra.mxu0 0.0
      %1096 = vmatprep.subr.mxu0 0.0
      %1097 = vmatpush1.msra.mxu0 0.0
      %1098 = vmatprep.subr.mxu0 0.0
      %1099 = vmatpush1.msra.mxu0 0.0
      %1100 = vmatprep.subr.mxu0 0.0
      %1101 = vmatpush1.msra.mxu0 0.0
      %1102 = vmatprep.subr.mxu0 0.0
      %1103 = vmatpush1.msra.mxu0 0.0
      %1104 = vmatprep.subr.mxu0 0.0
      %1105 = vmatpush1.msra.mxu0 0.0
      %1106 = vmatprep.subr.mxu0 0.0
      %1107 = vmatpush1.msra.mxu0 0.0
      %1108 = vmatprep.subr.mxu0 0.0
      %1109 = vmatpush1.msra.mxu0 0.0
      %1110 = vmatprep.subr.mxu0 0.0
      %1111 = vmatpush1.msra.mxu0 0.0
      %1112 = vmatprep.subr.mxu0 0.0
      %1113 = vmatpush1.msra.mxu0 0.0
      %1114 = vmatprep.subr.mxu0 0.0
      %1115 = vmatpush1.msra.mxu0 0.0
      %1116 = vmatprep.subr.mxu0 0.0
      %1117 = vmatpush1.msra.mxu0 0.0
      %1118 = vmatprep.subr.mxu0 0.0
      %1119 = vmatpush1.msra.mxu0 0.0
      %1120 = vmatprep.subr.mxu0 0.0
      %1121 = vmatpush1.msra.mxu0 0.0
      %1122 = vmatprep.subr.mxu0 0.0
      %1123 = vmatpush1.msra.mxu0 0.0
      %1124 = vmatprep.subr.mxu0 0.0
      %1125 = vmatpush1.msra.mxu0 0.0
      %1126 = vmatprep.subr.mxu0 0.0
      %1127 = vmatpush1.msra.mxu0 0.0
      %1128 = vmatprep.subr.mxu0 0.0
      %1129 = vmatpush1.msra.mxu0 0.0
      %1130 = vmatprep.subr.mxu0 0.0
      %1131 = vmatpush1.msra.mxu0 0.0
      %1132 = vmatprep.subr.mxu0 0.0
      %1133 = vmatpush1.msra.mxu0 0.0
      %1134 = vmatprep.subr.mxu0 0.0
      %1135 = vmatpush1.msra.mxu0 0.0
      %1136 = vmatprep.subr.mxu0 0.0
      %1137 = vmatpush1.msra.mxu0 0.0
      %1138 = vmatprep.subr.mxu0 0.0
      %1139 = vmatpush1.msra.mxu0 0.0
      %1140 = vmatprep.subr.mxu0 0.0
      %1141 = vmatpush1.msra.mxu0 0.0
      %1142 = vmatprep.subr.mxu0 0.0
      %1143 = vmatpush1.msra.mxu0 0.0
      %1144 = vmatprep.subr.mxu0 0.0
      %1145 = vmatpush1.msra.mxu0 0.0
      %1146 = vmatprep.subr.mxu0 0.0
      %1147 = vmatpush1.msra.mxu0 0.0
      %1148 = vmatprep.subr.mxu0 0.0
      %1149 = vmatpush1.msra.mxu0 0.0
      %1150 = vmatprep.subr.mxu0 0.0
      %1151 = vmatpush1.msra.mxu0 0.0
      %1152 = vmatprep.subr.mxu0 0.0
      %1153 = vmatpush1.msra.mxu0 0.0
      %1154 = vmatprep.mubr.f32.mxu0 0.0
      %1155 = vmatmul.mubr.f32.gmra.mrb[0].mxu0 %v938
      %v1156 = vpop.f32.mrb[0].mxu0
      %v1157 = vadd.f32 0.0, %v1156
      %v1158 = vpop.f32.mrb[0].mxu0
      %1159 = vdwg.mxu0
      %s1160 = sadd.s32 %s927, 24
      %s1161 = smul.u32 %s1160, 16
      %s1162 = scalar_lea.vmem [#allocation2], %s1161
      %v1163 = vld [vmem:[%s1162] sm:$0xff]
      %v1164 = vld [vmem:[%s1162 + $0x8] sm:$0xff]
      %1165 = vmatprep.subr.mxu0 0.0
      %1166 = vmatpush1.msra.mxu0 %v1163
      %1167 = vmatprep.subr.mxu0 0.0
      %1168 = vmatpush1.msra.mxu0 %v1164
      %1169 = vmatprep.subr.mxu0 0.0
      %1170 = vmatpush1.msra.mxu0 0.0
      %1171 = vmatprep.subr.mxu0 0.0
      %1172 = vmatpush1.msra.mxu0 0.0
      %1173 = vmatprep.subr.mxu0 0.0
      %1174 = vmatpush1.msra.mxu0 0.0
      %1175 = vmatprep.subr.mxu0 0.0
      %1176 = vmatpush1.msra.mxu0 0.0
      %1177 = vmatprep.subr.mxu0 0.0
      %1178 = vmatpush1.msra.mxu0 0.0
      %1179 = vmatprep.subr.mxu0 0.0
      %1180 = vmatpush1.msra.mxu0 0.0
      %1181 = vmatprep.subr.mxu0 0.0
      %1182 = vmatpush1.msra.mxu0 0.0
      %1183 = vmatprep.subr.mxu0 0.0
      %1184 = vmatpush1.msra.mxu0 0.0
      %1185 = vmatprep.subr.mxu0 0.0
      %1186 = vmatpush1.msra.mxu0 0.0
      %1187 = vmatprep.subr.mxu0 0.0
      %1188 = vmatpush1.msra.mxu0 0.0
      %1189 = vmatprep.subr.mxu0 0.0
      %1190 = vmatpush1.msra.mxu0 0.0
      %1191 = vmatprep.subr.mxu0 0.0
      %1192 = vmatpush1.msra.mxu0 0.0
      %1193 = vmatprep.subr.mxu0 0.0
      %1194 = vmatpush1.msra.mxu0 0.0
      %1195 = vmatprep.subr.mxu0 0.0
      %1196 = vmatpush1.msra.mxu0 0.0
      %1197 = vmatprep.subr.mxu0 0.0
      %1198 = vmatpush1.msra.mxu0 0.0
      %1199 = vmatprep.subr.mxu0 0.0
      %1200 = vmatpush1.msra.mxu0 0.0
      %1201 = vmatprep.subr.mxu0 0.0
      %1202 = vmatpush1.msra.mxu0 0.0
      %1203 = vmatprep.subr.mxu0 0.0
      %1204 = vmatpush1.msra.mxu0 0.0
      %1205 = vmatprep.subr.mxu0 0.0
      %1206 = vmatpush1.msra.mxu0 0.0
      %1207 = vmatprep.subr.mxu0 0.0
      %1208 = vmatpush1.msra.mxu0 0.0
      %1209 = vmatprep.subr.mxu0 0.0
      %1210 = vmatpush1.msra.mxu0 0.0
      %1211 = vmatprep.subr.mxu0 0.0
      %1212 = vmatpush1.msra.mxu0 0.0
      %1213 = vmatprep.subr.mxu0 0.0
      %1214 = vmatpush1.msra.mxu0 0.0
      %1215 = vmatprep.subr.mxu0 0.0
      %1216 = vmatpush1.msra.mxu0 0.0
      %1217 = vmatprep.subr.mxu0 0.0
      %1218 = vmatpush1.msra.mxu0 0.0
      %1219 = vmatprep.subr.mxu0 0.0
      %1220 = vmatpush1.msra.mxu0 0.0
      %1221 = vmatprep.subr.mxu0 0.0
      %1222 = vmatpush1.msra.mxu0 0.0
      %1223 = vmatprep.subr.mxu0 0.0
      %1224 = vmatpush1.msra.mxu0 0.0
      %1225 = vmatprep.subr.mxu0 0.0
      %1226 = vmatpush1.msra.mxu0 0.0
      %1227 = vmatprep.subr.mxu0 0.0
      %1228 = vmatpush1.msra.mxu0 0.0
      %1229 = vmatprep.mubr.f32.mxu0 0.0
      %1230 = vmatmul.mubr.f32.gmra.mrb[0].mxu0 %v938
      %v1231 = vpop.f32.mrb[0].mxu0
      %v1232 = vadd.f32 0.0, %v1231
      %v1233 = vpop.f32.mrb[0].mxu0
      %1234 = vdwg.mxu0
      %s1235 = sadd.s32 %s927, 32
      %s1236 = smul.u32 %s1235, 16
      %s1237 = scalar_lea.vmem [#allocation2], %s1236
      %v1238 = vld [vmem:[%s1237] sm:$0xff]
      %v1239 = vld [vmem:[%s1237 + $0x8] sm:$0xff]
      %1240 = vmatprep.subr.mxu0 0.0
      %1241 = vmatpush1.msra.mxu0 %v1238
      %1242 = vmatprep.subr.mxu0 0.0
      %1243 = vmatpush1.msra.mxu0 %v1239
      %1244 = vmatprep.subr.mxu0 0.0
      %1245 = vmatpush1.msra.mxu0 0.0
      %1246 = vmatprep.subr.mxu0 0.0
      %1247 = vmatpush1.msra.mxu0 0.0
      %1248 = vmatprep.subr.mxu0 0.0
      %1249 = vmatpush1.msra.mxu0 0.0
      %1250 = vmatprep.subr.mxu0 0.0
      %1251 = vmatpush1.msra.mxu0 0.0
      %1252 = vmatprep.subr.mxu0 0.0
      %1253 = vmatpush1.msra.mxu0 0.0
      %1254 = vmatprep.subr.mxu0 0.0
      %1255 = vmatpush1.msra.mxu0 0.0
      %1256 = vmatprep.subr.mxu0 0.0
      %1257 = vmatpush1.msra.mxu0 0.0
      %1258 = vmatprep.subr.mxu0 0.0
      %1259 = vmatpush1.msra.mxu0 0.0
      %1260 = vmatprep.subr.mxu0 0.0
      %1261 = vmatpush1.msra.mxu0 0.0
      %1262 = vmatprep.subr.mxu0 0.0
      %1263 = vmatpush1.msra.mxu0 0.0
      %1264 = vmatprep.subr.mxu0 0.0
      %1265 = vmatpush1.msra.mxu0 0.0
      %1266 = vmatprep.subr.mxu0 0.0
      %1267 = vmatpush1.msra.mxu0 0.0
      %1268 = vmatprep.subr.mxu0 0.0
      %1269 = vmatpush1.msra.mxu0 0.0
      %1270 = vmatprep.subr.mxu0 0.0
      %1271 = vmatpush1.msra.mxu0 0.0
      %1272 = vmatprep.subr.mxu0 0.0
      %1273 = vmatpush1.msra.mxu0 0.0
      %1274 = vmatprep.subr.mxu0 0.0
      %1275 = vmatpush1.msra.mxu0 0.0
      %1276 = vmatprep.subr.mxu0 0.0
      %1277 = vmatpush1.msra.mxu0 0.0
      %1278 = vmatprep.subr.mxu0 0.0
      %1279 = vmatpush1.msra.mxu0 0.0
      %1280 = vmatprep.subr.mxu0 0.0
      %1281 = vmatpush1.msra.mxu0 0.0
      %1282 = vmatprep.subr.mxu0 0.0
      %1283 = vmatpush1.msra.mxu0 0.0
      %1284 = vmatprep.subr.mxu0 0.0
      %1285 = vmatpush1.msra.mxu0 0.0
      %1286 = vmatprep.subr.mxu0 0.0
      %1287 = vmatpush1.msra.mxu0 0.0
      %1288 = vmatprep.subr.mxu0 0.0
      %1289 = vmatpush1.msra.mxu0 0.0
      %1290 = vmatprep.subr.mxu0 0.0
      %1291 = vmatpush1.msra.mxu0 0.0
      %1292 = vmatprep.subr.mxu0 0.0
      %1293 = vmatpush1.msra.mxu0 0.0
      %1294 = vmatprep.subr.mxu0 0.0
      %1295 = vmatpush1.msra.mxu0 0.0
      %1296 = vmatprep.subr.mxu0 0.0
      %1297 = vmatpush1.msra.mxu0 0.0
      %1298 = vmatprep.subr.mxu0 0.0
      %1299 = vmatpush1.msra.mxu0 0.0
      %1300 = vmatprep.subr.mxu0 0.0
      %1301 = vmatpush1.msra.mxu0 0.0
      %1302 = vmatprep.subr.mxu0 0.0
      %1303 = vmatpush1.msra.mxu0 0.0
      %1304 = vmatprep.mubr.f32.mxu0 0.0
      %1305 = vmatmul.mubr.f32.gmra.mrb[0].mxu0 %v938
      %v1306 = vpop.f32.mrb[0].mxu0
      %v1307 = vadd.f32 0.0, %v1306
      %v1308 = vpop.f32.mrb[0].mxu0
      %1309 = vdwg.mxu0
      %v1310 = vmul.f32 %v1007, %v1007
      %v1311 = vmul.f32 %v1082, %v1082
      %v1312 = vmul.f32 %v1007, %v1082
      %v1313 = vsub.f32 %v1157, %v1310
      %v1314 = vsub.f32 %v1232, %v1311
      %v1315 = vsub.f32 %v1307, %v1312
      %v1316 = vmul.f32 %v1315, 2.0
      %v1317 = vadd.f32 %v1316, 0.0009
      %v1318 = vadd.f32 %v1313, %v1314
      %v1319 = vadd.f32 %v1318, 0.0009
      %v1320 = vmul.f32 %v1312, 2.0
      %v1321 = vadd.f32 %v1320, 0.0001
      %v1322 = vmul.f32 %v1321, %v1317
      %v1323 = vadd.f32 %v1310, %v1311
      %v1324 = vadd.f32 %v1323, 0.0001
      %v1325 = vmul.f32 %v1324, %v1319
      %v1326 = vrcp.pop %v1325
      %v1327 = vmul.f32 %v1322, %v1326
      %v1328 = vsel %vm925, %v1327, 0.0
      %v1329 = vadd.f32 %v932, %v1328
    $region22: #{tpu_custom_call.1} parent=1 // loop_footer
      %s931 = sadd.s32 1, %s927
    $region23: #{tpu_custom_call.1} parent=1 // loop_footer_branch
      %926 = sbr.rel target = $region19
    $region24: #{tpu_custom_call.1} parent=1 // loop_exit
      _
    %1330 = vadd.xlane.f32.xlu0 %v932
    %v1331 = vpop.xlane.xlu0 %1330
    %v1332 = vrot.slane %v1331, 4
    %v1333 = vadd.f32 %v1331, %v1332
    %v1334 = vrot.slane %v1333, 2
    %v1335 = vadd.f32 %v1333, %v1334
    %v1336 = vrot.slane %v1335, 1
    %v1337 = vadd.f32 %v1335, %v1336
    %s1338 = vtos %v1337
    %v1339 = vstv %s1338
    %vm1340 = vcmask 0
    %1341 = vst.msk [vmem:[#allocation3] sm:$0x1] %vm1340, %v1339
    // Predicated region
    $region25: #{tpu_custom_call.1} parent=1 // pred_check
      _
    $region26: #{tpu_custom_call.1} parent=1 // pred_check_branch
      %1343 = sbr.rel (0) target = $region28
    $region27: #{tpu_custom_call.1} parent=1 // pred_region
      %s1345 = ssub.s32 16, 16
      %1346 = vsyncadd [#allocation4], %s1345
      %s1348 = sshll.u32 [#allocation3], 4
      %s1349 = int_to_ptr.vmem [resolvable:$true] %s1348
      %1351 = dma.vmem_to_hbm [thread:$0]  %s1349, 16, %s4, [#allocation4]
    $region28: #{tpu_custom_call.1} parent=1 // pred_fallthru
      _
    // Predicated region
    $region29: #{tpu_custom_call.1} parent=1 // pred_check
      _
    $region30: #{tpu_custom_call.1} parent=1 // pred_check_branch
      %1353 = sbr.rel (0) target = $region32
    $region31: #{tpu_custom_call.1} parent=1 // pred_region
      %1354 = dma.done [#allocation4], 16
    $region32: #{tpu_custom_call.1} parent=1 // pred_fallthru
      _
    %1355 = vsyncpa [#allocation4], 1

</llo_original>
